<compile_context>
chip_gen: v7x
topology: tpu7x:2x2x1
jax: 0.10.0
libtpu: 0.0.40
codegen_flags: <defaults>
</compile_context>

<pallas_src>
import functools

import jax
import jax.numpy as jnp
import numpy as np
from jax import lax
from jax.experimental import pallas as pl
from jax.experimental.pallas import tpu as pltpu


def _residual_kernel(x_ref, m1_ref, m2_ref, aux_ref, o_ref, pad_ref, lhs_ref,
                     *, Nb, H, WC):
    """One grid step = Nb batch elements, both conv blocks fused.

    x_ref  : (Nb, H, WC)        lane-dense input slab (WC = W*C), f32
    m1_ref : (3*WC, WC)         K-concatenated lowered conv-1 weights (BN folded), bf16
    m2_ref : (3*WC, WC)         K-concatenated lowered conv-2 weights (BN folded), bf16
    aux_ref: (8, WC)            rows: [bn1 bias, prelu slope, bn2 bias, 0...], f32
    o_ref  : (Nb, H, WC)
    pad_ref: (Nb*(H+2)+2, WC)   bf16 scratch: per-element H-padded frames + 2 tail rows
    lhs_ref: (Nb*(H+2), 3*WC)   bf16 scratch: K-concatenated (dy-shifted) LHS slab
    """
    F = H + 2                 # frame height per batch element (with halo rows)
    M = Nb * F                # matmul M dimension (includes 2 throwaway rows / frame)
    bf16 = jnp.bfloat16

    x = x_ref[...].astype(jnp.float32)        # (Nb, H, WC); kept in f32 for the skip
    aux = aux_ref[...]                        # (8, WC)
    b1 = aux[0:1, :]
    a1 = aux[1:2, :]
    b2 = aux[2:3, :]

    # --- build the batch-flattened, H-padded slab in VMEM (bf16) ---
    zrow = jnp.zeros((1, WC), bf16)
    for n in range(Nb):
        base = n * F
        pad_ref[pl.ds(base, 1), :] = zrow                       # top halo
        pad_ref[pl.ds(base + 1, H), :] = x[n].astype(bf16)      # interior rows
        pad_ref[pl.ds(base + H + 1, 1), :] = zrow               # bottom halo
    pad_ref[pl.ds(M, 2), :] = jnp.zeros((2, WC), bf16)          # tail guard rows

    # mask that zeroes the per-frame throwaway rows (row_in_frame >= H)
    row = lax.broadcasted_iota(jnp.int32, (M, 1), 0)
    valid = (row % F) < H

    def conv(m_ref):
        # K-concatenate the 3 dy-shifted slabs -> ONE (M, 3*WC) @ (3*WC, WC) MXU matmul.
        for dy in range(3):
            lhs_ref[:, dy * WC:(dy + 1) * WC] = pad_ref[pl.ds(dy, M), :]
        return jnp.dot(lhs_ref[...], m_ref[...],
                       preferred_element_type=jnp.float32)      # (M, WC) f32

    # --- conv block 1: matmul + folded BN bias + PReLU (all rows; garbage rows masked) ---
    y1 = conv(m1_ref) + b1
    y1 = jnp.where(y1 >= 0, y1, a1 * y1)
    y1 = jnp.where(valid, y1, 0.0)            # zero throwaway rows -> halos stay zero
    pad_ref[pl.ds(1, M), :] = y1.astype(bf16)

    # --- conv block 2: reuse the padded scratch + folded BN bias ---
    y2 = conv(m2_ref) + b2

    # --- fused residual add, extract valid rows per batch element ---
    for n in range(Nb):
        o_ref[n] = (y2[n * F:n * F + H] + x[n]).astype(o_ref.dtype)


def _fold_bn(gamma, beta, mean, var, eps=1e-5):
    """Eval-mode BN -> per-channel (scale, bias)."""
    scale = gamma / jnp.sqrt(var + eps)
    bias = beta - mean * scale
    return scale, bias


def _lower_conv_weight(w_hwio, scale, W):
    """Fold BN scale into HWIO weights and lower the 3x3 conv to a K-concatenated
    (3*W*C, W*C) banded matrix so the conv runs as ONE lane-dense MXU matmul.

    M[dy*WC + wi*C+ci, wo*C+co] = w[dy, wi-wo+1, ci, co]  if 0 <= wi-wo+1 < 3 else 0
    (this also encodes the zero-padding at the W boundaries).
    """
    C = w_hwio.shape[-1]
    w = w_hwio * scale.reshape(1, 1, 1, C)            # fold BN scale into out-channels
    wi = jnp.arange(W)[:, None]
    wo = jnp.arange(W)[None, :]
    dx = wi - wo + 1                                  # (W, W)
    valid = ((dx >= 0) & (dx < 3)).astype(w.dtype)
    dx_c = jnp.clip(dx, 0, 2)
    blocks = w[:, dx_c]                               # (3, W, W, C, C)
    blocks = blocks * valid[None, :, :, None, None]
    M = jnp.transpose(blocks, (0, 1, 3, 2, 4)).reshape(3, W * C, W * C)
    return M.reshape(3 * W * C, W * C)                # K-concatenated along dy


def make_residual_params(key, C):
    """Deterministic parameter init matching Residual(in_channels=C) shapes."""
    ks = jax.random.split(key, 10)
    p = {}
    # Convolution block 1: Conv2d(C,C,3,1,1,bias=False) + BN(C) + PReLU(C)
    p["w1"] = 0.1 * jax.random.normal(ks[0], (3, 3, C, C), jnp.float32)       # HWIO
    p["gamma1"] = 1.0 + 0.1 * jax.random.normal(ks[1], (C,), jnp.float32)
    p["beta1"] = 0.1 * jax.random.normal(ks[2], (C,), jnp.float32)
    p["mean1"] = 0.1 * jax.random.normal(ks[3], (C,), jnp.float32)
    p["var1"] = 1.0 + jnp.abs(0.1 * jax.random.normal(ks[4], (C,), jnp.float32))
    p["alpha1"] = jnp.full((C,), 0.25, jnp.float32)                           # PReLU default
    # Convolution block 2: Conv2d(C,C,3,1,1,bias=False) + BN(C), no activation
    p["w2"] = 0.1 * jax.random.normal(ks[5], (3, 3, C, C), jnp.float32)
    p["gamma2"] = 1.0 + 0.1 * jax.random.normal(ks[6], (C,), jnp.float32)
    p["beta2"] = 0.1 * jax.random.normal(ks[7], (C,), jnp.float32)
    p["mean2"] = 0.1 * jax.random.normal(ks[8], (C,), jnp.float32)
    p["var2"] = 1.0 + jnp.abs(0.1 * jax.random.normal(ks[9], (C,), jnp.float32))
    return p


def residual_forward(x_nchw, params, *, block_n=2):
    """Residual.forward:  out = Conv2(Conv1(x)) + x   (NCHW in / NCHW out)."""
    N, C, H, W = x_nchw.shape
    WC = W * C
    if N % block_n != 0:
        block_n = 1
    # NCHW -> NHWC -> lane-dense (N, H, W*C)
    x = jnp.transpose(x_nchw, (0, 2, 3, 1)).reshape(N, H, WC)

    s1, b1 = _fold_bn(params["gamma1"], params["beta1"], params["mean1"], params["var1"])
    s2, b2 = _fold_bn(params["gamma2"], params["beta2"], params["mean2"], params["var2"])
    m1 = _lower_conv_weight(params["w1"], s1, W).astype(jnp.bfloat16)   # (3*WC, WC)
    m2 = _lower_conv_weight(params["w2"], s2, W).astype(jnp.bfloat16)   # (3*WC, WC)

    # Merge the three per-channel vectors into one sublane-padded (8, WC) aux input.
    aux = jnp.zeros((8, WC), jnp.float32)
    aux = aux.at[0].set(jnp.tile(b1, W))
    aux = aux.at[1].set(jnp.tile(params["alpha1"], W))
    aux = aux.at[2].set(jnp.tile(b2, W))

    kernel = functools.partial(_residual_kernel, Nb=block_n, H=H, WC=WC)

    out = pl.pallas_call(
        kernel,
        out_shape=jax.ShapeDtypeStruct((N, H, WC), x.dtype),
        grid_spec=pltpu.PrefetchScalarGridSpec(
            num_scalar_prefetch=0,
            grid=(N // block_n,),
            in_specs=[
                pl.BlockSpec((block_n, H, WC), lambda n: (n, 0, 0)),   # input slab
                pl.BlockSpec((3 * WC, WC), lambda n: (0, 0)),          # conv-1 weights (bf16)
                pl.BlockSpec((3 * WC, WC), lambda n: (0, 0)),          # conv-2 weights (bf16)
                pl.BlockSpec((8, WC), lambda n: (0, 0)),               # merged bias/alpha
            ],
            out_specs=pl.BlockSpec((block_n, H, WC), lambda n: (n, 0, 0)),
            scratch_shapes=[
                pltpu.VMEM((block_n * (H + 2) + 2, WC), jnp.bfloat16),     # padded frames
                pltpu.VMEM((block_n * (H + 2), 3 * WC), jnp.bfloat16),     # K-concat LHS
            ],
        ),
        compiler_params=pltpu.CompilerParams(
            dimension_semantics=("parallel",)),
    )(x, m1, m2, aux)

    # lane-dense (N, H, W*C) -> NHWC -> NCHW
    return jnp.transpose(out.reshape(N, H, W, C), (0, 3, 1, 2))


def _reference(x_nchw, params):
    """Pure-JAX reference (lax.conv, f32) for correctness check."""
    x = jnp.transpose(x_nchw, (0, 2, 3, 1))
    dn = lax.conv_dimension_numbers(x.shape, params["w1"].shape, ("NHWC", "HWIO", "NHWC"))

    def block(inp, w, g, b, m, v, alpha):
        y = lax.conv_general_dilated(inp, w, (1, 1), ((1, 1), (1, 1)), dimension_numbers=dn)
        y = (y - m) / jnp.sqrt(v + 1e-5) * g + b
        if alpha is not None:
            y = jnp.where(y >= 0, y, alpha * y)
        return y

    y1 = block(x, params["w1"], params["gamma1"], params["beta1"],
               params["mean1"], params["var1"], params["alpha1"])
    y2 = block(y1, params["w2"], params["gamma2"], params["beta2"],
               params["mean2"], params["var2"], None)
    return jnp.transpose(y2 + x, (0, 3, 1, 2))


if __name__ == "__main__":
    # W*C = 128 -> lane-dense slabs; N=8 with block_n=2 -> 4 grid steps (>= 2 per core).
    N, C, H, W = 8, 8, 16, 16  # NCHW
    key = jax.random.PRNGKey(0)
    kx, kp = jax.random.split(key)
    x = jax.random.normal(kx, (N, C, H, W), jnp.float32)
    params = make_residual_params(kp, C)

    out = residual_forward(x, params, block_n=2)
    out = jax.block_until_ready(out)

    ref = _reference(x, params)
    # bf16 MXU operands (f32 accumulation / bias / PReLU / skip) -> loosened tolerance.
    np.testing.assert_allclose(np.asarray(out), np.asarray(ref), rtol=5e-2, atol=5e-2)

    print("KERNEL_OK")
</pallas_src>

<mosaic_0001>
module attributes {stable_mosaic.version = 11 : i64} {
  func.func @_residual_kernel(%arg0: i32, %arg1: memref<2x16x128xf32, #tpu.memory_space<vmem>>, %arg2: memref<384x128xbf16, #tpu.memory_space<vmem>>, %arg3: memref<384x128xbf16, #tpu.memory_space<vmem>>, %arg4: memref<8x128xf32, #tpu.memory_space<vmem>>, %arg5: memref<2x16x128xf32, #tpu.memory_space<vmem>>, %arg6: memref<38x128xbf16, #tpu.memory_space<vmem>>, %arg7: memref<36x384xbf16, #tpu.memory_space<vmem>>) attributes {dimension_semantics = [#tpu.dimension_semantics<parallel>], iteration_bounds = array<i64: 4>, scalar_prefetch = 0 : i64, scratch_operands = 2 : i64, tpu.core_type = #tpu.core_type<tc>, window_params = [{transform_indices = @transform_0, window_bounds = array<i64: 2, 16, 128>}, {pipeline_mode = #tpu.pipeline_mode<synchronous>, transform_indices = @transform_1, window_bounds = array<i64: 384, 128>}, {pipeline_mode = #tpu.pipeline_mode<synchronous>, transform_indices = @transform_2, window_bounds = array<i64: 384, 128>}, {pipeline_mode = #tpu.pipeline_mode<synchronous>, transform_indices = @transform_3, window_bounds = array<i64: 8, 128>}, {transform_indices = @transform_4, window_bounds = array<i64: 2, 16, 128>}]} {
    %c0 = arith.constant 0 : index
    %c0_0 = arith.constant 0 : index
    %c0_1 = arith.constant 0 : index
    %0 = vector.load %arg1[%c0, %c0_0, %c0_1] : memref<2x16x128xf32, #tpu.memory_space<vmem>>, vector<2x16x128xf32>
    %c0_2 = arith.constant 0 : index
    %c0_3 = arith.constant 0 : index
    %1 = vector.load %arg4[%c0_2, %c0_3] : memref<8x128xf32, #tpu.memory_space<vmem>>, vector<8x128xf32>
    %2 = vector.extract_strided_slice %1 {offsets = [0, 0], sizes = [1, 128], strides = [1, 1]} : vector<8x128xf32> to vector<1x128xf32>
    %3 = vector.extract_strided_slice %1 {offsets = [1, 0], sizes = [1, 128], strides = [1, 1]} : vector<8x128xf32> to vector<1x128xf32>
    %4 = vector.extract_strided_slice %1 {offsets = [2, 0], sizes = [1, 128], strides = [1, 1]} : vector<8x128xf32> to vector<1x128xf32>
    %cst = arith.constant 0.000000e+00 : bf16
    %5 = vector.broadcast %cst : bf16 to vector<1x128xbf16>
    %c0_4 = arith.constant 0 : index
    %c0_5 = arith.constant 0 : index
    %6 = vector.load %arg6[%c0_4, %c0_5] : memref<38x128xbf16, #tpu.memory_space<vmem>>, vector<1x128xbf16>
    tpu.vector_store %arg6[%c0_4, %c0_5], %5 {strides = array<i32>} : memref<38x128xbf16, #tpu.memory_space<vmem>>, vector<1x128xbf16>,
    %7 = vector.extract_strided_slice %0 {offsets = [0, 0, 0], sizes = [1, 16, 128], strides = [1, 1, 1]} : vector<2x16x128xf32> to vector<1x16x128xf32>
    %8 = vector.shape_cast %7 : vector<1x16x128xf32> to vector<16x128xf32>
    %9 = arith.truncf %8 : vector<16x128xf32> to vector<16x128xbf16>
    %c1 = arith.constant 1 : index
    %c0_6 = arith.constant 0 : index
    %10 = vector.load %arg6[%c1, %c0_6] : memref<38x128xbf16, #tpu.memory_space<vmem>>, vector<16x128xbf16>
    tpu.vector_store %arg6[%c1, %c0_6], %9 {strides = array<i32>} : memref<38x128xbf16, #tpu.memory_space<vmem>>, vector<16x128xbf16>,
    %c17 = arith.constant 17 : index
    %c0_7 = arith.constant 0 : index
    %11 = vector.load %arg6[%c17, %c0_7] : memref<38x128xbf16, #tpu.memory_space<vmem>>, vector<1x128xbf16>
    tpu.vector_store %arg6[%c17, %c0_7], %5 {strides = array<i32>} : memref<38x128xbf16, #tpu.memory_space<vmem>>, vector<1x128xbf16>,
    %c18 = arith.constant 18 : index
    %c0_8 = arith.constant 0 : index
    %12 = vector.load %arg6[%c18, %c0_8] : memref<38x128xbf16, #tpu.memory_space<vmem>>, vector<1x128xbf16>
    tpu.vector_store %arg6[%c18, %c0_8], %5 {strides = array<i32>} : memref<38x128xbf16, #tpu.memory_space<vmem>>, vector<1x128xbf16>,
    %13 = vector.extract_strided_slice %0 {offsets = [1, 0, 0], sizes = [1, 16, 128], strides = [1, 1, 1]} : vector<2x16x128xf32> to vector<1x16x128xf32>
    %14 = vector.shape_cast %13 : vector<1x16x128xf32> to vector<16x128xf32>
    %15 = arith.truncf %14 : vector<16x128xf32> to vector<16x128xbf16>
    %c19 = arith.constant 19 : index
    %c0_9 = arith.constant 0 : index
    %16 = vector.load %arg6[%c19, %c0_9] : memref<38x128xbf16, #tpu.memory_space<vmem>>, vector<16x128xbf16>
    tpu.vector_store %arg6[%c19, %c0_9], %15 {strides = array<i32>} : memref<38x128xbf16, #tpu.memory_space<vmem>>, vector<16x128xbf16>,
    %c35 = arith.constant 35 : index
    %c0_10 = arith.constant 0 : index
    %17 = vector.load %arg6[%c35, %c0_10] : memref<38x128xbf16, #tpu.memory_space<vmem>>, vector<1x128xbf16>
    tpu.vector_store %arg6[%c35, %c0_10], %5 {strides = array<i32>} : memref<38x128xbf16, #tpu.memory_space<vmem>>, vector<1x128xbf16>,
    %cst_11 = arith.constant 0.000000e+00 : bf16
    %18 = vector.broadcast %cst_11 : bf16 to vector<2x128xbf16>
    %c36 = arith.constant 36 : index
    %c0_12 = arith.constant 0 : index
    %19 = vector.load %arg6[%c36, %c0_12] : memref<38x128xbf16, #tpu.memory_space<vmem>>, vector<2x128xbf16>
    tpu.vector_store %arg6[%c36, %c0_12], %18 {strides = array<i32>} : memref<38x128xbf16, #tpu.memory_space<vmem>>, vector<2x128xbf16>,
    %20 = tpu.iota {dimensions = array<i32: 0>} : vector<36x1xi32>
    %c18_i32 = arith.constant 18 : i32
    %c0_i32 = arith.constant 0 : i32
    %21 = arith.cmpi eq, %c18_i32, %c0_i32 : i32
    %c1_i32 = arith.constant 1 : i32
    %22 = arith.select %21, %c1_i32, %c18_i32 : i32
    %23 = vector.broadcast %22 : i32 to vector<36x1xi32>
    %24 = arith.remsi %20, %23 : vector<36x1xi32>
    %c0_i32_13 = arith.constant 0 : i32
    %25 = vector.broadcast %c0_i32_13 : i32 to vector<36x1xi32>
    %26 = arith.cmpi ne, %24, %25 : vector<36x1xi32>
    %c0_i32_14 = arith.constant 0 : i32
    %27 = vector.broadcast %c0_i32_14 : i32 to vector<36x1xi32>
    %28 = arith.cmpi slt, %24, %27 : vector<36x1xi32>
    %c0_i32_15 = arith.constant 0 : i32
    %29 = arith.cmpi slt, %22, %c0_i32_15 : i32
    %30 = vector.broadcast %29 : i1 to vector<36x1xi1>
    %31 = vector.broadcast %30 : vector<36x1xi1> to vector<36x1xi1>
    %32 = arith.xori %28, %31 : vector<36x1xi1>
    %33 = arith.andi %32, %26 : vector<36x1xi1>
    %34 = vector.broadcast %22 : i32 to vector<36x1xi32>
    %35 = arith.addi %24, %34 : vector<36x1xi32>
    %36 = arith.select %33, %35, %24 : vector<36x1xi1>, vector<36x1xi32>
    %c16_i32 = arith.constant 16 : i32
    %37 = vector.broadcast %c16_i32 : i32 to vector<36x1xi32>
    %38 = arith.cmpi slt, %36, %37 : vector<36x1xi32>
    %c0_16 = arith.constant 0 : index
    %c0_17 = arith.constant 0 : index
    %39 = vector.load %arg6[%c0_16, %c0_17] : memref<38x128xbf16, #tpu.memory_space<vmem>>, vector<36x128xbf16>
    %c0_18 = arith.constant 0 : index
    %c0_19 = arith.constant 0 : index
    %40 = vector.load %arg7[%c0_18, %c0_19] : memref<36x384xbf16, #tpu.memory_space<vmem>>, vector<36x128xbf16>
    tpu.vector_store %arg7[%c0_18, %c0_19], %39 {strides = array<i32>} : memref<36x384xbf16, #tpu.memory_space<vmem>>, vector<36x128xbf16>,
    %c1_20 = arith.constant 1 : index
    %c0_21 = arith.constant 0 : index
    %41 = vector.load %arg6[%c1_20, %c0_21] : memref<38x128xbf16, #tpu.memory_space<vmem>>, vector<36x128xbf16>
    %c0_22 = arith.constant 0 : index
    %c128 = arith.constant 128 : index
    %42 = vector.load %arg7[%c0_22, %c128] : memref<36x384xbf16, #tpu.memory_space<vmem>>, vector<36x128xbf16>
    tpu.vector_store %arg7[%c0_22, %c128], %41 {strides = array<i32>} : memref<36x384xbf16, #tpu.memory_space<vmem>>, vector<36x128xbf16>,
    %c2 = arith.constant 2 : index
    %c0_23 = arith.constant 0 : index
    %43 = vector.load %arg6[%c2, %c0_23] : memref<38x128xbf16, #tpu.memory_space<vmem>>, vector<36x128xbf16>
    %c0_24 = arith.constant 0 : index
    %c256 = arith.constant 256 : index
    %44 = vector.load %arg7[%c0_24, %c256] : memref<36x384xbf16, #tpu.memory_space<vmem>>, vector<36x128xbf16>
    tpu.vector_store %arg7[%c0_24, %c256], %43 {strides = array<i32>} : memref<36x384xbf16, #tpu.memory_space<vmem>>, vector<36x128xbf16>,
    %c0_25 = arith.constant 0 : index
    %c0_26 = arith.constant 0 : index
    %45 = vector.load %arg7[%c0_25, %c0_26] : memref<36x384xbf16, #tpu.memory_space<vmem>>, vector<36x384xbf16>
    %c0_27 = arith.constant 0 : index
    %c0_28 = arith.constant 0 : index
    %46 = vector.load %arg2[%c0_27, %c0_28] : memref<384x128xbf16, #tpu.memory_space<vmem>>, vector<384x128xbf16>
    %cst_29 = arith.constant dense<0.000000e+00> : vector<36x128xf32>
    %47 = tpu.matmul %45, %46, %cst_29 {dimension_numbers = #tpu.dot_dimension_numbers<[1], [0], [0], [1], [0, 0, 1, 1], [], []>} : vector<36x384xbf16>, vector<384x128xbf16>, vector<36x128xf32> -> vector<36x128xf32>
    %48 = vector.broadcast %2 : vector<1x128xf32> to vector<36x128xf32>
    %49 = arith.addf %47, %48 : vector<36x128xf32>
    %cst_30 = arith.constant 0.000000e+00 : f32
    %50 = vector.broadcast %cst_30 : f32 to vector<36x128xf32>
    %51 = arith.cmpf oge, %49, %50 : vector<36x128xf32>
    %52 = vector.broadcast %3 : vector<1x128xf32> to vector<36x128xf32>
    %53 = arith.mulf %52, %49 : vector<36x128xf32>
    %54 = arith.select %51, %49, %53 : vector<36x128xi1>, vector<36x128xf32>
    %cst_31 = arith.constant 0.000000e+00 : f32
    %55 = vector.shape_cast %38 : vector<36x1xi1> to vector<36x1xi1>
    %56 = vector.broadcast %55 : vector<36x1xi1> to vector<36x128xi1>
    %57 = vector.broadcast %cst_31 : f32 to vector<36x128xf32>
    %58 = arith.select %56, %54, %57 : vector<36x128xi1>, vector<36x128xf32>
    %59 = arith.truncf %58 : vector<36x128xf32> to vector<36x128xbf16>
    %c1_32 = arith.constant 1 : index
    %c0_33 = arith.constant 0 : index
    %60 = vector.load %arg6[%c1_32, %c0_33] : memref<38x128xbf16, #tpu.memory_space<vmem>>, vector<36x128xbf16>
    tpu.vector_store %arg6[%c1_32, %c0_33], %59 {strides = array<i32>} : memref<38x128xbf16, #tpu.memory_space<vmem>>, vector<36x128xbf16>,
    %c0_34 = arith.constant 0 : index
    %c0_35 = arith.constant 0 : index
    %61 = vector.load %arg6[%c0_34, %c0_35] : memref<38x128xbf16, #tpu.memory_space<vmem>>, vector<36x128xbf16>
    %c0_36 = arith.constant 0 : index
    %c0_37 = arith.constant 0 : index
    %62 = vector.load %arg7[%c0_36, %c0_37] : memref<36x384xbf16, #tpu.memory_space<vmem>>, vector<36x128xbf16>
    tpu.vector_store %arg7[%c0_36, %c0_37], %61 {strides = array<i32>} : memref<36x384xbf16, #tpu.memory_space<vmem>>, vector<36x128xbf16>,
    %c1_38 = arith.constant 1 : index
    %c0_39 = arith.constant 0 : index
    %63 = vector.load %arg6[%c1_38, %c0_39] : memref<38x128xbf16, #tpu.memory_space<vmem>>, vector<36x128xbf16>
    %c0_40 = arith.constant 0 : index
    %c128_41 = arith.constant 128 : index
    %64 = vector.load %arg7[%c0_40, %c128_41] : memref<36x384xbf16, #tpu.memory_space<vmem>>, vector<36x128xbf16>
    tpu.vector_store %arg7[%c0_40, %c128_41], %63 {strides = array<i32>} : memref<36x384xbf16, #tpu.memory_space<vmem>>, vector<36x128xbf16>,
    %c2_42 = arith.constant 2 : index
    %c0_43 = arith.constant 0 : index
    %65 = vector.load %arg6[%c2_42, %c0_43] : memref<38x128xbf16, #tpu.memory_space<vmem>>, vector<36x128xbf16>
    %c0_44 = arith.constant 0 : index
    %c256_45 = arith.constant 256 : index
    %66 = vector.load %arg7[%c0_44, %c256_45] : memref<36x384xbf16, #tpu.memory_space<vmem>>, vector<36x128xbf16>
    tpu.vector_store %arg7[%c0_44, %c256_45], %65 {strides = array<i32>} : memref<36x384xbf16, #tpu.memory_space<vmem>>, vector<36x128xbf16>,
    %c0_46 = arith.constant 0 : index
    %c0_47 = arith.constant 0 : index
    %67 = vector.load %arg7[%c0_46, %c0_47] : memref<36x384xbf16, #tpu.memory_space<vmem>>, vector<36x384xbf16>
    %c0_48 = arith.constant 0 : index
    %c0_49 = arith.constant 0 : index
    %68 = vector.load %arg3[%c0_48, %c0_49] : memref<384x128xbf16, #tpu.memory_space<vmem>>, vector<384x128xbf16>
    %cst_50 = arith.constant dense<0.000000e+00> : vector<36x128xf32>
    %69 = tpu.matmul %67, %68, %cst_50 {dimension_numbers = #tpu.dot_dimension_numbers<[1], [0], [0], [1], [0, 0, 1, 1], [], []>} : vector<36x384xbf16>, vector<384x128xbf16>, vector<36x128xf32> -> vector<36x128xf32>
    %70 = vector.broadcast %4 : vector<1x128xf32> to vector<36x128xf32>
    %71 = arith.addf %69, %70 : vector<36x128xf32>
    %72 = vector.extract_strided_slice %71 {offsets = [0, 0], sizes = [16, 128], strides = [1, 1]} : vector<36x128xf32> to vector<16x128xf32>
    %73 = vector.extract_strided_slice %0 {offsets = [0, 0, 0], sizes = [1, 16, 128], strides = [1, 1, 1]} : vector<2x16x128xf32> to vector<1x16x128xf32>
    %74 = vector.shape_cast %73 : vector<1x16x128xf32> to vector<16x128xf32>
    %75 = arith.addf %72, %74 : vector<16x128xf32>
    %c0_51 = arith.constant 0 : index
    %c0_52 = arith.constant 0 : index
    %c0_53 = arith.constant 0 : index
    %76 = vector.load %arg5[%c0_51, %c0_52, %c0_53] : memref<2x16x128xf32, #tpu.memory_space<vmem>>, vector<1x16x128xf32>
    %77 = vector.shape_cast %76 : vector<1x16x128xf32> to vector<16x128xf32>
    %78 = vector.shape_cast %75 : vector<16x128xf32> to vector<1x16x128xf32>
    tpu.vector_store %arg5[%c0_51, %c0_52, %c0_53], %78 {strides = array<i32>} : memref<2x16x128xf32, #tpu.memory_space<vmem>>, vector<1x16x128xf32>,
    %79 = vector.extract_strided_slice %71 {offsets = [18, 0], sizes = [16, 128], strides = [1, 1]} : vector<36x128xf32> to vector<16x128xf32>
    %80 = vector.extract_strided_slice %0 {offsets = [1, 0, 0], sizes = [1, 16, 128], strides = [1, 1, 1]} : vector<2x16x128xf32> to vector<1x16x128xf32>
    %81 = vector.shape_cast %80 : vector<1x16x128xf32> to vector<16x128xf32>
    %82 = arith.addf %79, %81 : vector<16x128xf32>
    %c1_54 = arith.constant 1 : index
    %c0_55 = arith.constant 0 : index
    %c0_56 = arith.constant 0 : index
    %83 = vector.load %arg5[%c1_54, %c0_55, %c0_56] : memref<2x16x128xf32, #tpu.memory_space<vmem>>, vector<1x16x128xf32>
    %84 = vector.shape_cast %83 : vector<1x16x128xf32> to vector<16x128xf32>
    %85 = vector.shape_cast %82 : vector<16x128xf32> to vector<1x16x128xf32>
    tpu.vector_store %arg5[%c1_54, %c0_55, %c0_56], %85 {strides = array<i32>} : memref<2x16x128xf32, #tpu.memory_space<vmem>>, vector<1x16x128xf32>,
    return
  }
  func.func @transform_0(%arg0: i32) -> (i32, i32, i32) {
    %c0_i32 = arith.constant 0 : i32
    %c0_i32_0 = arith.constant 0 : i32
    %c0_i32_1 = arith.constant 0 : i32
    return %arg0, %c0_i32, %c0_i32_0 : i32, i32, i32
  }
  func.func @transform_1(%arg0: i32) -> (i32, i32) {
    %c0_i32 = arith.constant 0 : i32
    %c0_i32_0 = arith.constant 0 : i32
    %c0_i32_1 = arith.constant 0 : i32
    return %c0_i32, %c0_i32_0 : i32, i32
  }
  func.func @transform_2(%arg0: i32) -> (i32, i32) {
    %c0_i32 = arith.constant 0 : i32
    %c0_i32_0 = arith.constant 0 : i32
    %c0_i32_1 = arith.constant 0 : i32
    return %c0_i32, %c0_i32_0 : i32, i32
  }
  func.func @transform_3(%arg0: i32) -> (i32, i32) {
    %c0_i32 = arith.constant 0 : i32
    %c0_i32_0 = arith.constant 0 : i32
    %c0_i32_1 = arith.constant 0 : i32
    return %c0_i32, %c0_i32_0 : i32, i32
  }
  func.func @transform_4(%arg0: i32) -> (i32, i32, i32) {
    %c0_i32 = arith.constant 0 : i32
    %c0_i32_0 = arith.constant 0 : i32
    %c0_i32_1 = arith.constant 0 : i32
    return %arg0, %c0_i32, %c0_i32_0 : i32, i32, i32
  }
}

</mosaic_0001>

<llo_original>
// kernel: tpu_custom_call.1
$region0: #{tpu_custom_call.1}
  #allocation0 [shape = 'u32[]', space=smem, size = 0x4, offset = 0x4, fixed_abs, tag = 'smem constant byte address 0x4 - core index']
  #allocation1 [shape = 'u32[144,128]{1,0:T(1,128)}', space=vmem, size = 0x12000, scoped, tag = 'internal scratch']
  #allocation2 [shape = 'bf16[38,128]{1,0:T(8,128)(2,1)}', space=vmem, size = 0x2800, scoped, tag = 'scratch operand']
  #allocation3 [shape = 'bf16[36,384]{1,0:T(8,128)(2,1)}', space=vmem, size = 0x7800, scoped, tag = 'scratch operand']
  %s0 = inlined_call_operand.hbm [shape: f32[8,16,128], index: 0, kind: input, shape index: {}]
  %s1 = inlined_call_operand.hbm [shape: bf16[384,128], index: 1, kind: input, shape index: {}]
  %s2 = inlined_call_operand.hbm [shape: bf16[384,128], index: 2, kind: input, shape index: {}]
  %s3 = inlined_call_operand.vmem [shape: f32[8,128], index: 3, kind: input, shape index: {}]
  %s4 = inlined_call_operand.hbm [shape: f32[8,16,128], index: 4, kind: output, shape index: {}]
  %s5 = sld [smem:[#allocation0]]
  $region61: #{tpu_custom_call.1} parent=0
    _
  %s7 = ssub.s32 1, %s5
  %s8 = scalar_select 0, %s7, %s5
  $region1: #{tpu_custom_call.1} parent=0
    #allocation4 [shape = 'u8[32768]{0}', space=vmem, size = 0x8000, scoped, tag = 'input window, operand 0']
    #allocation5 [shape = 's32[2]{0}', space=sflag, size = 0x8, scoped, tag = 'scoped memory for tpu_custom_call.1']
    #allocation6 [shape = 's32[2]{0}', space=sflag, size = 0x8, scoped, tag = 'scoped memory for tpu_custom_call.1']
    #allocation7 [shape = 'u8[98304]{0}', space=vmem, size = 0x18000, scoped, tag = 'input window, operand 1, single buffered']
    #allocation8 [shape = 's32[1]{0}', space=sflag, size = 0x4, scoped, tag = 'scoped memory for tpu_custom_call.1']
    #allocation9 [shape = 'u8[98304]{0}', space=vmem, size = 0x18000, scoped, tag = 'input window, operand 2, single buffered']
    #allocation10 [shape = 'u8[32768]{0}', space=vmem, size = 0x8000, scoped, tag = 'output window, operand 0']
    %9 = vsyncpa [#allocation5], 0
    %s10 = scalar_lea.sflag [#allocation5], 1
    %11 = vsyncpa %s10, 0
    %12 = vsyncpa [#allocation8], 0
    %13 = vsyncpa [#allocation6], 0
    %s14 = scalar_lea.sflag [#allocation6], 1
    %15 = vsyncpa %s14, 0
    loop: start=0, step=1, limit=6
    $region2: #{tpu_custom_call.1} parent=1 // loop_pre_header
      _
    $region3: #{tpu_custom_call.1} parent=1 // loop_header
      %s17 = sphi 0, %s21
      %p18 = scmp.ge.s32.totalorder %s17, 6
      %s27 = sphi 0, %s29
      %s30 = sphi 0, %s27
      %s31 = sphi 0, %s30
      %s47 = sphi 0, %s31
      %s51 = sphi 0, %s51
      %s53 = sphi 0, %s51
      %s54 = sphi 0, %s53
      %s68 = sphi 0, %s54
      %s72 = sphi 0, %s72
      %s74 = sphi 0, %s72
      %s75 = sphi 0, %s74
      %s89 = sphi 0, %s75
      %s93 = sphi 0, %s93
      %s95 = sphi 0, %s93
      %s96 = sphi 0, %s95
      %s110 = sphi 0, %s96
      %s116 = sphi 0, %s118
      %s119 = sphi 0, %s116
      %s120 = sphi 0, %s119
      %s136 = sphi 0, %s120
    $region4: #{tpu_custom_call.1} parent=1 // loop_header_branch
      %20 = sbr.rel (%p18) target = $region8
    $region5: #{tpu_custom_call.1} parent=1 // loop_body
      %s22 = ssub.s32 %s17, 1
      %s23 = ssub.s32 %s17, 2
      %s24 = sadd.s32 %s17, 1
      %s25 = ssub.s32 %s17, %s24
      %p26 = scmp.eq.s32.totalorder %s25, 0
      %s28 = sadd.s32 %s27, 1
      %s29 = scalar_select %p26, %s27, %s28
      %p32 = pneg %p26
      %p33 = scmp.eq.s32.totalorder %s17, 3
      %p34 = por %p32, %p33
      %p35 = scmp.ne.s32.totalorder %s27, %s30
      %p36 = scmp.eq.s32.totalorder %s17, 0
      %p37 = por %p35, %p36
      %p38 = scmp.ne.s32.totalorder %s27, %s30
      %p39 = scmp.eq.s32.totalorder %s22, 3
      %p40 = por %p38, %p39
      %p41 = scmp.ne.s32.totalorder %s30, %s31
      %p42 = scmp.eq.s32.totalorder %s22, 0
      %p43 = por %p41, %p42
      %p44 = scmp.ne.s32.totalorder %s30, %s31
      %p45 = scmp.eq.s32.totalorder %s23, 3
      %p46 = por %p44, %p45
      %p48 = scmp.ne.s32.totalorder %s31, %s47
      %p49 = scmp.eq.s32.totalorder %s23, 0
      %p50 = por %p48, %p49
      %s52 = sadd.s32 %s51, 1
      %p55 = scmp.eq.s32.totalorder %s17, 3
      %p56 = scmp.ne.s32.totalorder %s51, %s53
      %p57 = scmp.eq.s32.totalorder %s17, 0
      %p58 = por %p56, %p57
      %p59 = scmp.ne.s32.totalorder %s51, %s53
      %p60 = scmp.eq.s32.totalorder %s22, 3
      %p61 = por %p59, %p60
      %p62 = scmp.ne.s32.totalorder %s53, %s54
      %p63 = scmp.eq.s32.totalorder %s22, 0
      %p64 = por %p62, %p63
      %p65 = scmp.ne.s32.totalorder %s53, %s54
      %p66 = scmp.eq.s32.totalorder %s23, 3
      %p67 = por %p65, %p66
      %p69 = scmp.ne.s32.totalorder %s54, %s68
      %p70 = scmp.eq.s32.totalorder %s23, 0
      %p71 = por %p69, %p70
      %s73 = sadd.s32 %s72, 1
      %p76 = scmp.eq.s32.totalorder %s17, 3
      %p77 = scmp.ne.s32.totalorder %s72, %s74
      %p78 = scmp.eq.s32.totalorder %s17, 0
      %p79 = por %p77, %p78
      %p80 = scmp.ne.s32.totalorder %s72, %s74
      %p81 = scmp.eq.s32.totalorder %s22, 3
      %p82 = por %p80, %p81
      %p83 = scmp.ne.s32.totalorder %s74, %s75
      %p84 = scmp.eq.s32.totalorder %s22, 0
      %p85 = por %p83, %p84
      %p86 = scmp.ne.s32.totalorder %s74, %s75
      %p87 = scmp.eq.s32.totalorder %s23, 3
      %p88 = por %p86, %p87
      %p90 = scmp.ne.s32.totalorder %s75, %s89
      %p91 = scmp.eq.s32.totalorder %s23, 0
      %p92 = por %p90, %p91
      %s94 = sadd.s32 %s93, 1
      %p97 = scmp.eq.s32.totalorder %s17, 3
      %p98 = scmp.ne.s32.totalorder %s93, %s95
      %p99 = scmp.eq.s32.totalorder %s17, 0
      %p100 = por %p98, %p99
      %p101 = scmp.ne.s32.totalorder %s93, %s95
      %p102 = scmp.eq.s32.totalorder %s22, 3
      %p103 = por %p101, %p102
      %p104 = scmp.ne.s32.totalorder %s95, %s96
      %p105 = scmp.eq.s32.totalorder %s22, 0
      %p106 = por %p104, %p105
      %p107 = scmp.ne.s32.totalorder %s95, %s96
      %p108 = scmp.eq.s32.totalorder %s23, 3
      %p109 = por %p107, %p108
      %p111 = scmp.ne.s32.totalorder %s96, %s110
      %p112 = scmp.eq.s32.totalorder %s23, 0
      %p113 = por %p111, %p112
      %s114 = ssub.s32 %s17, %s24
      %p115 = scmp.eq.s32.totalorder %s114, 0
      %s117 = sadd.s32 %s116, 1
      %s118 = scalar_select %p115, %s116, %s117
      %p121 = pneg %p115
      %p122 = scmp.eq.s32.totalorder %s17, 3
      %p123 = por %p121, %p122
      %p124 = scmp.ne.s32.totalorder %s116, %s119
      %p125 = scmp.eq.s32.totalorder %s17, 0
      %p126 = por %p124, %p125
      %p127 = scmp.ne.s32.totalorder %s116, %s119
      %p128 = scmp.eq.s32.totalorder %s22, 3
      %p129 = por %p127, %p128
      %p130 = scmp.ne.s32.totalorder %s119, %s120
      %p131 = scmp.eq.s32.totalorder %s22, 0
      %p132 = por %p130, %p131
      %p133 = scmp.ne.s32.totalorder %s119, %s120
      %p134 = scmp.eq.s32.totalorder %s23, 3
      %p135 = por %p133, %p134
      %p137 = scmp.ne.s32.totalorder %s120, %s136
      %p138 = scmp.eq.s32.totalorder %s23, 0
      %p139 = por %p137, %p138
      %p140 = scmp.le.s32.totalorder 1, %s17
      %p141 = scmp.lt.s32.totalorder %s17, 5
      %p142 = pnand %p140, %p141
      %p143 = pneg %p142
      // Predicated region
      $region9: #{tpu_custom_call.1} parent=5 // pred_check
        _
      $region10: #{tpu_custom_call.1} parent=5 // pred_check_branch
        %145 = sbr.rel (%p142) target = $region12
      $region11: #{tpu_custom_call.1} parent=5 // pred_region
        %s146 = ssub.s32 %s17, 1
        // Predicated region
        $region13: #{tpu_custom_call.1} parent=11 // pred_check
          %p147 = pneg %p64
        $region14: #{tpu_custom_call.1} parent=11 // pred_check_branch
          %149 = sbr.rel (%p147) target = $region16
        $region15: #{tpu_custom_call.1} parent=11 // pred_region
          %s151 = ssub.s32 3072, 3072
          %152 = vsyncadd [#allocation8], %s151
          %s153 = sshll.u32 [#allocation7], 4
          %s154 = int_to_ptr.vmem [resolvable:$true] %s153
          %159 = dma.hbm_to_vmem [thread:$0]  %s1, 3072, %s154, [#allocation8], 64, 64, 4
        $region16: #{tpu_custom_call.1} parent=11 // pred_fallthru
          _
        // Predicated region
        $region17: #{tpu_custom_call.1} parent=11 // pred_check
          %p160 = pneg %p85
        $region18: #{tpu_custom_call.1} parent=11 // pred_check_branch
          %162 = sbr.rel (%p160) target = $region20
        $region19: #{tpu_custom_call.1} parent=11 // pred_region
          %s164 = ssub.s32 3072, 3072
          %165 = vsyncadd [#allocation8], %s164
          %s166 = sshll.u32 [#allocation9], 4
          %s167 = int_to_ptr.vmem [resolvable:$true] %s166
          %172 = dma.hbm_to_vmem [thread:$0]  %s2, 3072, %s167, [#allocation8], 64, 64, 4
        $region20: #{tpu_custom_call.1} parent=11 // pred_fallthru
          _
        // Predicated region
        $region21: #{tpu_custom_call.1} parent=11 // pred_check
          %p173 = pneg %p106
        $region22: #{tpu_custom_call.1} parent=11 // pred_check_branch
          %175 = sbr.rel (%p173) target = $region24
        $region23: #{tpu_custom_call.1} parent=11 // pred_region
          _
        $region24: #{tpu_custom_call.1} parent=11 // pred_fallthru
          _
      $region12: #{tpu_custom_call.1} parent=5 // pred_fallthru
        _
      %p176 = scmp.lt.s32.totalorder %s17, 4
      // Predicated region
      $region25: #{tpu_custom_call.1} parent=5 // pred_check
        %p177 = pneg %p176
      $region26: #{tpu_custom_call.1} parent=5 // pred_check_branch
        %179 = sbr.rel (%p177) target = $region28
      $region27: #{tpu_custom_call.1} parent=5 // pred_region
        // Predicated region
        $region29: #{tpu_custom_call.1} parent=27 // pred_check
          %p180 = pneg %p37
        $region30: #{tpu_custom_call.1} parent=27 // pred_check_branch
          %182 = sbr.rel (%p180) target = $region32
        $region31: #{tpu_custom_call.1} parent=27 // pred_region
          %s183 = sand.u32 %s27, 1
          %s184 = scalar_lea.sflag [#allocation5], %s183
          %s185 = sand.u32 %s27, 1
          %s186 = smul.addr %s185, 32
          %s187 = scalar_lea.vmem [#allocation4], %s186
          %s188 = smul.u32 2, %s17
          %s190 = ssub.s32 512, 512
          %191 = vsyncadd %s184, %s190
          %s192 = smul.addr %s188, 2
          %s193 = smul.addr %s192, 128
          %s194 = scalar_lea.hbm %s0, %s193
          %s195 = sshll.u32 %s187, 4
          %s196 = int_to_ptr.vmem [resolvable:$true] %s195
          %201 = dma.hbm_to_vmem [thread:$0]  %s194, 512, %s196, %s184, 128, 128, 8
        $region32: #{tpu_custom_call.1} parent=27 // pred_fallthru
          _
      $region28: #{tpu_custom_call.1} parent=5 // pred_fallthru
        _
      %p202 = scmp.le.s32.totalorder 1, %s17
      %p203 = scmp.lt.s32.totalorder %s17, 5
      %p204 = pnand %p202, %p203
      %p205 = pneg %p204
      // Predicated region
      $region33: #{tpu_custom_call.1} parent=5 // pred_check
        _
      $region34: #{tpu_custom_call.1} parent=5 // pred_check_branch
        %207 = sbr.rel (%p204) target = $region36
      $region35: #{tpu_custom_call.1} parent=5 // pred_region
        %s208 = ssub.s32 %s17, 1
        %s209 = sand.u32 %s30, 1
        %s210 = scalar_lea.sflag [#allocation5], %s209
        %s211 = sand.u32 %s30, 1
        %s212 = smul.addr %s211, 32
        %s213 = scalar_lea.vmem [#allocation4], %s212
        // Predicated region
        $region37: #{tpu_custom_call.1} parent=35 // pred_check
          %p214 = pneg %p43
        $region38: #{tpu_custom_call.1} parent=35 // pred_check_branch
          %216 = sbr.rel (%p214) target = $region40
        $region39: #{tpu_custom_call.1} parent=35 // pred_region
          %217 = dma.done %s210, 512
        $region40: #{tpu_custom_call.1} parent=35 // pred_fallthru
          _
        // Predicated region
        $region41: #{tpu_custom_call.1} parent=35 // pred_check
          %p218 = pneg %p64
        $region42: #{tpu_custom_call.1} parent=35 // pred_check_branch
          %220 = sbr.rel (%p218) target = $region44
        $region43: #{tpu_custom_call.1} parent=35 // pred_region
          %221 = dma.done [#allocation8], 3072
        $region44: #{tpu_custom_call.1} parent=35 // pred_fallthru
          _
        // Predicated region
        $region45: #{tpu_custom_call.1} parent=35 // pred_check
          %p222 = pneg %p85
        $region46: #{tpu_custom_call.1} parent=35 // pred_check_branch
          %224 = sbr.rel (%p222) target = $region48
        $region47: #{tpu_custom_call.1} parent=35 // pred_region
          %225 = dma.done [#allocation8], 3072
        $region48: #{tpu_custom_call.1} parent=35 // pred_fallthru
          _
        %s226 = sand.u32 %s30, 1
        %s227 = scalar_lea.sflag [#allocation5], %s226
        %s228 = sand.u32 %s30, 1
        %s229 = smul.addr %s228, 32
        %s230 = scalar_lea.vmem [#allocation4], %s229
        %p231 = pneg %p43
        %p232 = pneg %p40
        %p233 = pneg %p64
        %p234 = pneg %p61
        %p235 = pneg %p85
        %p236 = pneg %p82
        %p237 = pneg %p106
        %p238 = pneg %p103
        %p239 = pneg %p132
        %p240 = pneg %p129
        %s241 = sand.u32 %s119, 1
        %s242 = scalar_lea.sflag [#allocation6], %s241
        %s243 = sand.u32 %s119, 1
        %s244 = smul.addr %s243, 32
        %s245 = scalar_lea.vmem [#allocation10], %s244
        %s246 = smul.u32 2, %s22
        %s247 = smul.u32 2, %s22
        %v249 = vld [vmem:[%s213] sm:$0xff]
        %v250 = vld [vmem:[%s213 + $0x8] sm:$0xff]
        %v251 = vld [vmem:[%s213 + $0x10] sm:$0xff]
        %v252 = vld [vmem:[%s213 + $0x18] sm:$0xff]
        %v253 = vld [vmem:[%s3] sm:$0xff]
        %vm254 = vcmask 1040384
        %vm255 = vsmask.f32 256
        %vm256 = vmand %vm254, %vm255
        %v257 = vld [vmem:[#allocation2] sm:$0x1]
        %v258 = vsel %vm256, 0, %v257
        %259 = vst [vmem:[#allocation2] sm:$0x1] %v258
        %v260 = vpack.c.bf16 %v250, %v249
        %v262 = vunpack.c.l.b16 %v260
        %v263 = vunpack.c.h.b16 %v260
        %v264 = vpack.c.b16 %v262, %v262
        %v265 = vpack.c.b16 %v263, %v263
        %vm266 = vsmask.f32 4368
        %vm267 = vmor %vm255, %vm266
        %v269 = vshrl.u32 %v264, 16
        %v271 = vrot.slane %v269, 7
        %v272 = vshll.u32 %v264, 16
        %v274 = vor.u32 %v271, %v272
        %v275 = vrot.slane %v271, 4
        %v277 = vshrl.u32 %v265, 16
        %v279 = vrot.slane %v277, 7
        %v280 = vshll.u32 %v265, 16
        %v282 = vor.u32 %v279, %v280
        %v283 = vsel %vm267, %v275, %v282
        %v284 = vrot.slane %v279, 4
        %vm288 = vcmask 1043456
        %vm289 = vsmask.f32 7938
        %vm290 = vmand %vm288, %vm289
        %v291 = vld [vmem:[#allocation2] sm:$0xf]
        %v292 = vsel %vm290, %v274, %v291
        %293 = vst [vmem:[#allocation2] sm:$0xf] %v292
        %294 = vst [vmem:[#allocation2 + $0x4] sm:$0xf] %v283
        %v295 = vld [vmem:[#allocation2 + $0x8] sm:$0x1]
        %v296 = vsel %vm256, %v284, %v295
        %297 = vst [vmem:[#allocation2 + $0x8] sm:$0x1] %v296
        %vm298 = vmand %vm254, %vm289
        %v299 = vld [vmem:[#allocation2 + $0x8] sm:$0x1]
        %v300 = vsel %vm298, 0, %v299
        %301 = vst [vmem:[#allocation2 + $0x8] sm:$0x1] %v300
        %vm302 = vcmask 1041409
        %vm303 = vsmask.f32 1280
        %vm304 = vmand %vm302, %vm303
        %v305 = vld [vmem:[#allocation2 + $0x8] sm:$0x2]
        %v306 = vsel %vm304, 0, %v305
        %307 = vst [vmem:[#allocation2 + $0x8] sm:$0x2] %v306
        %v308 = vpack.c.bf16 %v252, %v251
        %v310 = vunpack.c.l.b16 %v308
        %v311 = vunpack.c.h.b16 %v308
        %v312 = vpack.c.b16 %v310, %v310
        %v313 = vpack.c.b16 %v311, %v311
        %vm314 = vsmask.f32 5392
        %vm315 = vmor %vm303, %vm314
        %v317 = vshrl.u32 %v312, 16
        %v319 = vrot.slane %v317, 6
        %v320 = vshll.u32 %v312, 16
        %v322 = vrot.slane %v320, 7
        %v323 = vor.u32 %v319, %v322
        %v324 = vrot.slane %v323, 4
        %v326 = vshrl.u32 %v313, 16
        %v328 = vrot.slane %v326, 6
        %v329 = vshll.u32 %v313, 16
        %v331 = vrot.slane %v329, 7
        %v332 = vor.u32 %v328, %v331
        %v333 = vsel %vm315, %v324, %v332
        %v334 = vrot.slane %v332, 4
        %vm338 = vcmask 1043457
        %vm339 = vsmask.f32 7942
        %vm340 = vmand %vm338, %vm339
        %v341 = vld [vmem:[#allocation2 + $0x8] sm:$0xe]
        %v342 = vsel %vm340, %v323, %v341
        %343 = vst [vmem:[#allocation2 + $0x8] sm:$0xe] %v342
        %344 = vst [vmem:[#allocation2 + $0xc] sm:$0xf] %v333
        %vm345 = vcmask 1041408
        %vm346 = vmand %vm345, %vm303
        %v347 = vld [vmem:[#allocation2 + $0x10] sm:$0x3]
        %v348 = vsel %vm346, %v334, %v347
        %349 = vst [vmem:[#allocation2 + $0x10] sm:$0x3] %v348
        %vm350 = vmand %vm302, %vm339
        %v351 = vld [vmem:[#allocation2 + $0x10] sm:$0x2]
        %v352 = vsel %vm350, 0, %v351
        %353 = vst [vmem:[#allocation2 + $0x10] sm:$0x2] %v352
        %354 = vst [vmem:[#allocation2 + $0x10] sm:$0x4] 0
        %v355 = vlaneseq
        %v356 = vshrl.u32 %v355, 7
        %v357 = vadd.s32 %v356, 8
        %v358 = vadd.s32 %v356, 16
        %v359 = vadd.s32 %v356, 24
        %v360 = vadd.s32 %v356, 32
        %vm361 = vcmp.lt.s32.totalorder %v356, 0
        %v362 = vsub.s32 0, %v356
        %v363 = vsel %vm361, %v362, %v356
        %v364 = vmul.u32.u64.compose %v363, 3817748708
        %v365 = vextract.low.u32 %v364
        %v366 = vextract.high.u32 %v364
        %v367 = vshrl.u32 %v366, 4
        %v368 = vmul.u32 %v367, 18
        %v369 = vsub.s32 %v363, %v368
        %v370 = vsub.s32 0, %v369
        %v371 = vsel %vm361, %v370, %v369
        %vm372 = vcmp.lt.s32.totalorder %v357, 0
        %v373 = vsub.s32 0, %v357
        %v374 = vsel %vm372, %v373, %v357
        %v375 = vmul.u32.u64.compose %v374, 3817748708
        %v376 = vextract.low.u32 %v375
        %v377 = vextract.high.u32 %v375
        %v378 = vshrl.u32 %v377, 4
        %v379 = vmul.u32 %v378, 18
        %v380 = vsub.s32 %v374, %v379
        %v381 = vsub.s32 0, %v380
        %v382 = vsel %vm372, %v381, %v380
        %vm383 = vcmp.lt.s32.totalorder %v358, 0
        %v384 = vsub.s32 0, %v358
        %v385 = vsel %vm383, %v384, %v358
        %v386 = vmul.u32.u64.compose %v385, 3817748708
        %v387 = vextract.low.u32 %v386
        %v388 = vextract.high.u32 %v386
        %v389 = vshrl.u32 %v388, 4
        %v390 = vmul.u32 %v389, 18
        %v391 = vsub.s32 %v385, %v390
        %v392 = vsub.s32 0, %v391
        %v393 = vsel %vm383, %v392, %v391
        %vm394 = vcmp.lt.s32.totalorder %v359, 0
        %v395 = vsub.s32 0, %v359
        %v396 = vsel %vm394, %v395, %v359
        %v397 = vmul.u32.u64.compose %v396, 3817748708
        %v398 = vextract.low.u32 %v397
        %v399 = vextract.high.u32 %v397
        %v400 = vshrl.u32 %v399, 4
        %v401 = vmul.u32 %v400, 18
        %v402 = vsub.s32 %v396, %v401
        %v403 = vsub.s32 0, %v402
        %v404 = vsel %vm394, %v403, %v402
        %vm405 = vcmp.lt.s32.totalorder %v360, 0
        %v406 = vsub.s32 0, %v360
        %v407 = vsel %vm405, %v406, %v360
        %v408 = vmul.u32.u64.compose %v407, 3817748708
        %v409 = vextract.low.u32 %v408
        %v410 = vextract.high.u32 %v408
        %v411 = vshrl.u32 %v410, 4
        %v412 = vmul.u32 %v411, 18
        %v413 = vsub.s32 %v407, %v412
        %v414 = vsub.s32 0, %v413
        %v415 = vsel %vm405, %v414, %v413
        %vm416 = vcmp.ne.s32.totalorder %v371, 0
        %vm417 = vcmp.ne.s32.totalorder %v382, 0
        %vm418 = vcmp.ne.s32.totalorder %v393, 0
        %vm419 = vcmp.ne.s32.totalorder %v404, 0
        %vm420 = vcmp.ne.s32.totalorder %v415, 0
        %vm421 = vcmp.lt.s32.totalorder %v371, 0
        %vm422 = vcmp.lt.s32.totalorder %v382, 0
        %vm423 = vcmp.lt.s32.totalorder %v393, 0
        %vm424 = vcmp.lt.s32.totalorder %v404, 0
        %vm425 = vcmp.lt.s32.totalorder %v415, 0
        %vm426 = vmand %vm421, %vm416
        %vm427 = vmand %vm422, %vm417
        %vm428 = vmand %vm423, %vm418
        %vm429 = vmand %vm424, %vm419
        %vm430 = vmand %vm425, %vm420
        %v431 = vadd.s32 %v371, 18
        %v432 = vadd.s32 %v382, 18
        %v433 = vadd.s32 %v393, 18
        %v434 = vadd.s32 %v404, 18
        %v435 = vadd.s32 %v415, 18
        %v436 = vsel %vm426, %v431, %v371
        %v437 = vsel %vm427, %v432, %v382
        %v438 = vsel %vm428, %v433, %v393
        %v439 = vsel %vm429, %v434, %v404
        %v440 = vsel %vm430, %v435, %v415
        %vm441 = vcmp.lt.s32.totalorder %v436, 16
        %vm442 = vcmp.lt.s32.totalorder %v437, 16
        %vm443 = vcmp.lt.s32.totalorder %v438, 16
        %vm444 = vcmp.lt.s32.totalorder %v439, 16
        %vm445 = vcmp.lt.s32.totalorder %v440, 16
        %v446 = vld [vmem:[#allocation2] sm:$0xf]
        %v447 = vld [vmem:[#allocation2 + $0x4] sm:$0xf]
        %v448 = vld [vmem:[#allocation2 + $0x8] sm:$0xf]
        %v449 = vld [vmem:[#allocation2 + $0xc] sm:$0xf]
        %v450 = vld [vmem:[#allocation2 + $0x10] sm:$0x3]
        %451 = vst [vmem:[#allocation3] sm:$0xf] %v446
        %452 = vst [vmem:[#allocation3 + $0xc] sm:$0xf] %v447
        %453 = vst [vmem:[#allocation3 + $0x18] sm:$0xf] %v448
        %454 = vst [vmem:[#allocation3 + $0x24] sm:$0xf] %v449
        %455 = vst [vmem:[#allocation3 + $0x30] sm:$0x3] %v450
        %v456 = vld [vmem:[#allocation2] sm:$0xf]
        %v457 = vld [vmem:[#allocation2 + $0x4] sm:$0xf]
        %v458 = vld [vmem:[#allocation2 + $0x8] sm:$0xf]
        %v459 = vld [vmem:[#allocation2 + $0xc] sm:$0xf]
        %v460 = vld [vmem:[#allocation2 + $0x10] sm:$0x7]
        %vm461 = vsmask.f32 3328
        %vm462 = vsmask.f32 7440
        %vm463 = vmor %vm461, %vm462
        %v465 = vshrl.u32 %v456, 16
        %v467 = vrot.slane %v465, 4
        %v468 = vshll.u32 %v456, 16
        %v470 = vrot.slane %v468, 5
        %v471 = vor.u32 %v467, %v470
        %v472 = vrot.slane %v471, 4
        %v474 = vshll.u32 %v457, 16
        %v476 = vrot.slane %v474, 5
        %v477 = vsel %vm463, %v472, %v476
        %v478 = vshrl.u32 %v457, 16
        %v480 = vrot.slane %v478, 4
        %v481 = vor.u32 %v480, %v476
        %v482 = vrot.slane %v481, 4
        %v484 = vshll.u32 %v458, 16
        %v486 = vrot.slane %v484, 5
        %v487 = vsel %vm463, %v482, %v486
        %v488 = vshrl.u32 %v458, 16
        %v490 = vrot.slane %v488, 4
        %v491 = vor.u32 %v490, %v486
        %v492 = vrot.slane %v491, 4
        %v494 = vshll.u32 %v459, 16
        %v496 = vrot.slane %v494, 5
        %v497 = vsel %vm463, %v492, %v496
        %v498 = vshrl.u32 %v459, 16
        %v500 = vrot.slane %v498, 4
        %v501 = vor.u32 %v500, %v496
        %v502 = vrot.slane %v501, 4
        %v504 = vshll.u32 %v460, 16
        %v506 = vrot.slane %v504, 5
        %v507 = vsel %vm463, %v502, %v506
        %v508 = vshrl.u32 %v460, 16
        %v510 = vrot.slane %v508, 4
        %v511 = vor.u32 %v510, %v506
        %v512 = vrot.slane %v511, 4
        %518 = vst [vmem:[#allocation3 + $0x4] sm:$0xf] %v477
        %519 = vst [vmem:[#allocation3 + $0x10] sm:$0xf] %v487
        %520 = vst [vmem:[#allocation3 + $0x1c] sm:$0xf] %v497
        %521 = vst [vmem:[#allocation3 + $0x28] sm:$0xf] %v507
        %522 = vst [vmem:[#allocation3 + $0x34] sm:$0x3] %v512
        %v523 = vld [vmem:[#allocation2] sm:$0xe]
        %v524 = vld [vmem:[#allocation2 + $0x4] sm:$0xf]
        %v525 = vld [vmem:[#allocation2 + $0x8] sm:$0xf]
        %v526 = vld [vmem:[#allocation2 + $0xc] sm:$0xf]
        %v527 = vld [vmem:[#allocation2 + $0x10] sm:$0x7]
        %vm533 = vcmask 1042432
        %vm534 = vcmask 1046532
        %vm535 = vmor %vm533, %vm534
        %v536 = vrot.slane %v523, 5
        %v537 = vrot.slane %v536, 4
        %v538 = vrot.slane %v524, 5
        %v539 = vsel %vm535, %v537, %v538
        %v540 = vrot.slane %v538, 4
        %v541 = vrot.slane %v525, 5
        %v542 = vsel %vm535, %v540, %v541
        %v543 = vrot.slane %v541, 4
        %v544 = vrot.slane %v526, 5
        %v545 = vsel %vm535, %v543, %v544
        %v546 = vrot.slane %v544, 4
        %v547 = vrot.slane %v527, 5
        %v548 = vsel %vm535, %v546, %v547
        %v549 = vrot.slane %v547, 4
        %555 = vst [vmem:[#allocation3 + $0x8] sm:$0xf] %v539
        %556 = vst [vmem:[#allocation3 + $0x14] sm:$0xf] %v542
        %557 = vst [vmem:[#allocation3 + $0x20] sm:$0xf] %v545
        %558 = vst [vmem:[#allocation3 + $0x2c] sm:$0xf] %v548
        %559 = vst [vmem:[#allocation3 + $0x38] sm:$0x3] %v549
        %v560 = vld [vmem:[#allocation3] sm:$0xff]
        %v561 = vld [vmem:[#allocation3 + $0x8] sm:$0xf]
        %v562 = vld [vmem:[#allocation3 + $0xc] sm:$0xff]
        %v563 = vld [vmem:[#allocation3 + $0x14] sm:$0xf]
        %v564 = vld [vmem:[#allocation3 + $0x18] sm:$0xff]
        %v565 = vld [vmem:[#allocation3 + $0x20] sm:$0xf]
        %v566 = vld [vmem:[#allocation3 + $0x24] sm:$0xff]
        %v567 = vld [vmem:[#allocation3 + $0x2c] sm:$0xf]
        %v568 = vld [vmem:[#allocation3 + $0x30] sm:$0x33]
        %v569 = vld [vmem:[#allocation3 + $0x38] sm:$0x3]
        %v570 = vld [vmem:[#allocation7] sm:$0xf]
        %v571 = vld [vmem:[#allocation7 + $0x4] sm:$0xf]
        %v572 = vld [vmem:[#allocation7 + $0x8] sm:$0xf]
        %v573 = vld [vmem:[#allocation7 + $0xc] sm:$0xf]
        %v574 = vld [vmem:[#allocation7 + $0x10] sm:$0xf]
        %v575 = vld [vmem:[#allocation7 + $0x14] sm:$0xf]
        %v576 = vld [vmem:[#allocation7 + $0x18] sm:$0xf]
        %v577 = vld [vmem:[#allocation7 + $0x1c] sm:$0xf]
        %v578 = vld [vmem:[#allocation7 + $0x20] sm:$0xf]
        %v579 = vld [vmem:[#allocation7 + $0x24] sm:$0xf]
        %v580 = vld [vmem:[#allocation7 + $0x28] sm:$0xf]
        %v581 = vld [vmem:[#allocation7 + $0x2c] sm:$0xf]
        %v582 = vld [vmem:[#allocation7 + $0x30] sm:$0xf]
        %v583 = vld [vmem:[#allocation7 + $0x34] sm:$0xf]
        %v584 = vld [vmem:[#allocation7 + $0x38] sm:$0xf]
        %v585 = vld [vmem:[#allocation7 + $0x3c] sm:$0xf]
        %v586 = vld [vmem:[#allocation7 + $0x40] sm:$0xf]
        %v587 = vld [vmem:[#allocation7 + $0x44] sm:$0xf]
        %v588 = vld [vmem:[#allocation7 + $0x48] sm:$0xf]
        %v589 = vld [vmem:[#allocation7 + $0x4c] sm:$0xf]
        %v590 = vld [vmem:[#allocation7 + $0x50] sm:$0xf]
        %v591 = vld [vmem:[#allocation7 + $0x54] sm:$0xf]
        %v592 = vld [vmem:[#allocation7 + $0x58] sm:$0xf]
        %v593 = vld [vmem:[#allocation7 + $0x5c] sm:$0xf]
        %v594 = vld [vmem:[#allocation7 + $0x60] sm:$0xf]
        %v595 = vld [vmem:[#allocation7 + $0x64] sm:$0xf]
        %v596 = vld [vmem:[#allocation7 + $0x68] sm:$0xf]
        %v597 = vld [vmem:[#allocation7 + $0x6c] sm:$0xf]
        %v598 = vld [vmem:[#allocation7 + $0x70] sm:$0xf]
        %v599 = vld [vmem:[#allocation7 + $0x74] sm:$0xf]
        %v600 = vld [vmem:[#allocation7 + $0x78] sm:$0xf]
        %v601 = vld [vmem:[#allocation7 + $0x7c] sm:$0xf]
        %v602 = vld [vmem:[#allocation7 + $0x80] sm:$0xf]
        %v603 = vld [vmem:[#allocation7 + $0x84] sm:$0xf]
        %v604 = vld [vmem:[#allocation7 + $0x88] sm:$0xf]
        %v605 = vld [vmem:[#allocation7 + $0x8c] sm:$0xf]
        %v606 = vld [vmem:[#allocation7 + $0x90] sm:$0xf]
        %v607 = vld [vmem:[#allocation7 + $0x94] sm:$0xf]
        %v608 = vld [vmem:[#allocation7 + $0x98] sm:$0xf]
        %v609 = vld [vmem:[#allocation7 + $0x9c] sm:$0xf]
        %v610 = vld [vmem:[#allocation7 + $0xa0] sm:$0xf]
        %v611 = vld [vmem:[#allocation7 + $0xa4] sm:$0xf]
        %v612 = vld [vmem:[#allocation7 + $0xa8] sm:$0xf]
        %v613 = vld [vmem:[#allocation7 + $0xac] sm:$0xf]
        %v614 = vld [vmem:[#allocation7 + $0xb0] sm:$0xf]
        %v615 = vld [vmem:[#allocation7 + $0xb4] sm:$0xf]
        %v616 = vld [vmem:[#allocation7 + $0xb8] sm:$0xf]
        %v617 = vld [vmem:[#allocation7 + $0xbc] sm:$0xf]
        %v618 = vlaneseq
        %v619 = vshrl.u32 %v618, 7
        %v620 = vsub.s32 0, %v619
        %v621 = vrot.slane %v253, %v620
        %v632 = vunpack.c.l.b16 %v560
        %v633 = vunpack.c.h.b16 %v560
        %v634 = vunpack.c.l.b16 %v561
        %v635 = vunpack.c.l.b16 %v562
        %v636 = vunpack.c.h.b16 %v562
        %v637 = vunpack.c.l.b16 %v563
        %v638 = vunpack.c.l.b16 %v564
        %v639 = vunpack.c.h.b16 %v564
        %v640 = vunpack.c.l.b16 %v565
        %v641 = vunpack.c.l.b16 %v566
        %v642 = vunpack.c.h.b16 %v566
        %v643 = vunpack.c.l.b16 %v567
        %v644 = vunpack.c.l.b16 %v568
        %v645 = vunpack.c.h.b16 %v568
        %v646 = vunpack.c.l.b16 %v569
        %v647 = vpack.c.b16 %v635, %v632
        %v648 = vpack.c.b16 %v636, %v633
        %v649 = vpack.c.b16 %v637, %v634
        %v650 = vpack.c.b16 %v641, %v638
        %v651 = vpack.c.b16 %v642, %v639
        %v652 = vpack.c.b16 %v643, %v640
        %v653 = vpack.c.b16 %v644, %v644
        %v654 = vpack.c.b16 %v645, %v645
        %v655 = vpack.c.b16 %v646, %v646
        %v713 = vunpack.c.l.b16 %v570
        %v714 = vunpack.c.l.b16 %v571
        %v715 = vunpack.c.l.b16 %v572
        %v716 = vunpack.c.l.b16 %v573
        %v717 = vunpack.c.l.b16 %v574
        %v718 = vunpack.c.l.b16 %v575
        %v719 = vunpack.c.l.b16 %v576
        %v720 = vunpack.c.l.b16 %v577
        %v721 = vunpack.c.l.b16 %v578
        %v722 = vunpack.c.l.b16 %v579
        %v723 = vunpack.c.l.b16 %v580
        %v724 = vunpack.c.l.b16 %v581
        %v725 = vunpack.c.l.b16 %v582
        %v726 = vunpack.c.l.b16 %v583
        %v727 = vunpack.c.l.b16 %v584
        %v728 = vunpack.c.l.b16 %v585
        %v729 = vunpack.c.l.b16 %v586
        %v730 = vunpack.c.l.b16 %v587
        %v731 = vunpack.c.l.b16 %v588
        %v732 = vunpack.c.l.b16 %v589
        %v733 = vunpack.c.l.b16 %v590
        %v734 = vunpack.c.l.b16 %v591
        %v735 = vunpack.c.l.b16 %v592
        %v736 = vunpack.c.l.b16 %v593
        %v737 = vunpack.c.l.b16 %v594
        %v738 = vunpack.c.l.b16 %v595
        %v739 = vunpack.c.l.b16 %v596
        %v740 = vunpack.c.l.b16 %v597
        %v741 = vunpack.c.l.b16 %v598
        %v742 = vunpack.c.l.b16 %v599
        %v743 = vunpack.c.l.b16 %v600
        %v744 = vunpack.c.l.b16 %v601
        %v745 = vunpack.c.l.b16 %v602
        %v746 = vunpack.c.l.b16 %v603
        %v747 = vunpack.c.l.b16 %v604
        %v748 = vunpack.c.l.b16 %v605
        %v749 = vunpack.c.l.b16 %v606
        %v750 = vunpack.c.l.b16 %v607
        %v751 = vunpack.c.l.b16 %v608
        %v752 = vunpack.c.l.b16 %v609
        %v753 = vunpack.c.l.b16 %v610
        %v754 = vunpack.c.l.b16 %v611
        %v755 = vunpack.c.l.b16 %v612
        %v756 = vunpack.c.l.b16 %v613
        %v757 = vunpack.c.l.b16 %v614
        %v758 = vunpack.c.l.b16 %v615
        %v759 = vunpack.c.l.b16 %v616
        %v760 = vunpack.c.l.b16 %v617
        %v761 = vpack.c.b16 %v714, %v713
        %v762 = vpack.c.b16 %v716, %v715
        %v763 = vpack.c.b16 %v718, %v717
        %v764 = vpack.c.b16 %v720, %v719
        %v765 = vpack.c.b16 %v722, %v721
        %v766 = vpack.c.b16 %v724, %v723
        %v767 = vpack.c.b16 %v726, %v725
        %v768 = vpack.c.b16 %v728, %v727
        %v769 = vpack.c.b16 %v730, %v729
        %v770 = vpack.c.b16 %v732, %v731
        %v771 = vpack.c.b16 %v734, %v733
        %v772 = vpack.c.b16 %v736, %v735
        %v773 = vpack.c.b16 %v738, %v737
        %v774 = vpack.c.b16 %v740, %v739
        %v775 = vpack.c.b16 %v742, %v741
        %v776 = vpack.c.b16 %v744, %v743
        %v777 = vpack.c.b16 %v746, %v745
        %v778 = vpack.c.b16 %v748, %v747
        %v779 = vpack.c.b16 %v750, %v749
        %v780 = vpack.c.b16 %v752, %v751
        %v781 = vpack.c.b16 %v754, %v753
        %v782 = vpack.c.b16 %v756, %v755
        %v783 = vpack.c.b16 %v758, %v757
        %v784 = vpack.c.b16 %v760, %v759
        %809 = vmatprep.subr.bf16.mxu0 0
        %810 = vmatpush1.bf16.msra.mxu0 %v761
        %811 = vmatprep.subr.bf16.mxu0 0
        %812 = vmatpush1.bf16.msra.mxu0 %v762
        %813 = vmatprep.subr.bf16.mxu0 0
        %814 = vmatpush1.bf16.msra.mxu0 %v763
        %815 = vmatprep.subr.bf16.mxu0 0
        %816 = vmatpush1.bf16.msra.mxu0 %v764
        %817 = vmatprep.subr.bf16.mxu0 0
        %818 = vmatpush1.bf16.msra.mxu0 %v765
        %819 = vmatprep.subr.bf16.mxu0 0
        %820 = vmatpush1.bf16.msra.mxu0 %v766
        %821 = vmatprep.subr.bf16.mxu0 0
        %822 = vmatpush1.bf16.msra.mxu0 %v767
        %823 = vmatprep.subr.bf16.mxu0 0
        %824 = vmatpush1.bf16.msra.mxu0 %v768
        %825 = vmatprep.subr.bf16.mxu0 0
        %826 = vmatpush1.bf16.msra.mxu0 %v769
        %827 = vmatprep.subr.bf16.mxu0 0
        %828 = vmatpush1.bf16.msra.mxu0 %v770
        %829 = vmatprep.subr.bf16.mxu0 0
        %830 = vmatpush1.bf16.msra.mxu0 %v771
        %831 = vmatprep.subr.bf16.mxu0 0
        %832 = vmatpush1.bf16.msra.mxu0 %v772
        %833 = vmatprep.subr.bf16.mxu0 0
        %834 = vmatpush1.bf16.msra.mxu0 %v773
        %835 = vmatprep.subr.bf16.mxu0 0
        %836 = vmatpush1.bf16.msra.mxu0 %v774
        %837 = vmatprep.subr.bf16.mxu0 0
        %838 = vmatpush1.bf16.msra.mxu0 %v775
        %839 = vmatprep.subr.bf16.mxu0 0
        %840 = vmatpush1.bf16.msra.mxu0 %v776
        %841 = vmatprep.mubr.bf16.mxu0 %v648
        %842 = vmatmul.mubr.bf16.gmra.mrb[0].mxu0 %v647
        %v843 = vpop.f32.mrb[0].mxu0
        %v844 = vadd.f32 %v621, %v843
        %v845 = vpop.f32.mrb[0].mxu0
        %v846 = vpop.f32.mrb[0].mxu0
        %v847 = vadd.f32 %v621, %v846
        %v848 = vpop.f32.mrb[0].mxu0
        %849 = vmatprep.mubr.bf16.mxu0 %v651
        %850 = vmatmul.mubr.bf16.gmra.mrb[0].mxu0 %v650
        %v851 = vpop.f32.mrb[0].mxu0
        %v852 = vadd.f32 %v621, %v851
        %v853 = vpop.f32.mrb[0].mxu0
        %v854 = vpop.f32.mrb[0].mxu0
        %v855 = vadd.f32 %v621, %v854
        %v856 = vpop.f32.mrb[0].mxu0
        %857 = vmatprep.mubr.bf16.mxu0 %v654
        %858 = vmatmul.mubr.bf16.gmra.mrb[0].mxu0 %v653
        %v859 = vpop.f32.mrb[0].mxu0
        %v860 = vadd.f32 %v621, %v859
        %v861 = vpop.f32.mrb[0].mxu0
        %v862 = vpop.f32.mrb[0].mxu0
        %v863 = vpop.f32.mrb[0].mxu0
        %864 = vdwg.mxu0
        %865 = vmatprep.subr.bf16.mxu0 0
        %866 = vmatpush1.bf16.msra.mxu0 %v777
        %867 = vmatprep.subr.bf16.mxu0 0
        %868 = vmatpush1.bf16.msra.mxu0 %v778
        %869 = vmatprep.subr.bf16.mxu0 0
        %870 = vmatpush1.bf16.msra.mxu0 %v779
        %871 = vmatprep.subr.bf16.mxu0 0
        %872 = vmatpush1.bf16.msra.mxu0 %v780
        %873 = vmatprep.subr.bf16.mxu0 0
        %874 = vmatpush1.bf16.msra.mxu0 %v781
        %875 = vmatprep.subr.bf16.mxu0 0
        %876 = vmatpush1.bf16.msra.mxu0 %v782
        %877 = vmatprep.subr.bf16.mxu0 0
        %878 = vmatpush1.bf16.msra.mxu0 %v783
        %879 = vmatprep.subr.bf16.mxu0 0
        %880 = vmatpush1.bf16.msra.mxu0 %v784
        %881 = vmatprep.subr.bf16.mxu0 0
        %882 = vmatpush1.bf16.msra.mxu0 0
        %883 = vmatprep.subr.bf16.mxu0 0
        %884 = vmatpush1.bf16.msra.mxu0 0
        %885 = vmatprep.subr.bf16.mxu0 0
        %886 = vmatpush1.bf16.msra.mxu0 0
        %887 = vmatprep.subr.bf16.mxu0 0
        %888 = vmatpush1.bf16.msra.mxu0 0
        %889 = vmatprep.subr.bf16.mxu0 0
        %890 = vmatpush1.bf16.msra.mxu0 0
        %891 = vmatprep.subr.bf16.mxu0 0
        %892 = vmatpush1.bf16.msra.mxu0 0
        %893 = vmatprep.subr.bf16.mxu0 0
        %894 = vmatpush1.bf16.msra.mxu0 0
        %895 = vmatprep.subr.bf16.mxu0 0
        %896 = vmatpush1.bf16.msra.mxu0 0
        %897 = vmatprep.mubr.bf16.mxu0 0
        %898 = vmatmul.mubr.bf16.gmra.mrb[0].mxu0 %v649
        %v899 = vpop.f32.mrb[0].mxu0
        %v900 = vadd.f32 %v844, %v899
        %v901 = vpop.f32.mrb[0].mxu0
        %v902 = vpop.f32.mrb[0].mxu0
        %v903 = vadd.f32 %v847, %v902
        %v904 = vpop.f32.mrb[0].mxu0
        %905 = vmatprep.mubr.bf16.mxu0 0
        %906 = vmatmul.mubr.bf16.gmra.mrb[0].mxu0 %v652
        %v907 = vpop.f32.mrb[0].mxu0
        %v908 = vadd.f32 %v852, %v907
        %v909 = vpop.f32.mrb[0].mxu0
        %v910 = vpop.f32.mrb[0].mxu0
        %v911 = vadd.f32 %v855, %v910
        %v912 = vpop.f32.mrb[0].mxu0
        %913 = vmatprep.mubr.bf16.mxu0 0
        %914 = vmatmul.mubr.bf16.gmra.mrb[0].mxu0 %v655
        %v915 = vpop.f32.mrb[0].mxu0
        %v916 = vadd.f32 %v860, %v915
        %v917 = vpop.f32.mrb[0].mxu0
        %v918 = vpop.f32.mrb[0].mxu0
        %v919 = vpop.f32.mrb[0].mxu0
        %920 = vdwg.mxu0
        %vm921 = vcmp.ge.f32.partialorder %v900, 0.0
        %vm922 = vcmp.ge.f32.partialorder %v903, 0.0
        %vm923 = vcmp.ge.f32.partialorder %v908, 0.0
        %vm924 = vcmp.ge.f32.partialorder %v911, 0.0
        %vm925 = vcmp.ge.f32.partialorder %v916, 0.0
        %v926 = vlaneseq
        %v927 = vshrl.u32 %v926, 7
        %v928 = vsub.s32 1, %v927
        %v929 = vrot.slane %v253, %v928
        %v930 = vmul.f32 %v929, %v900
        %v931 = vmul.f32 %v929, %v903
        %v932 = vmul.f32 %v929, %v908
        %v933 = vmul.f32 %v929, %v911
        %v934 = vmul.f32 %v929, %v916
        %v935 = vsel %vm921, %v900, %v930
        %v936 = vsel %vm922, %v903, %v931
        %v937 = vsel %vm923, %v908, %v932
        %v938 = vsel %vm924, %v911, %v933
        %v939 = vsel %vm925, %v916, %v934
        %v940 = vsel %vm441, 1, 0
        %v941 = vsel %vm442, 1, 0
        %v942 = vsel %vm443, 1, 0
        %v943 = vsel %vm444, 1, 0
        %v944 = vsel %vm445, 1, 0
        %vm945 = vcmp.eq.s32.totalorder %v940, 1
        %vm946 = vcmp.eq.s32.totalorder %v941, 1
        %vm947 = vcmp.eq.s32.totalorder %v942, 1
        %vm948 = vcmp.eq.s32.totalorder %v943, 1
        %vm949 = vcmp.eq.s32.totalorder %v944, 1
        %v950 = vsel %vm945, %v935, 0.0
        %v951 = vsel %vm946, %v936, 0.0
        %v952 = vsel %vm947, %v937, 0.0
        %v953 = vsel %vm948, %v938, 0.0
        %v954 = vsel %vm949, %v939, 0.0
        %v955 = vpack.c.bf16 %v951, %v950
        %v956 = vpack.c.bf16 %v953, %v952
        %v957 = vpack.c.bf16 %v954, %v954
        %v961 = vunpack.c.l.b16 %v955
        %v962 = vunpack.c.h.b16 %v955
        %v963 = vunpack.c.l.b16 %v956
        %v964 = vunpack.c.h.b16 %v956
        %v965 = vunpack.c.l.b16 %v957
        %v966 = vpack.c.b16 %v961, %v961
        %v967 = vpack.c.b16 %v962, %v962
        %v968 = vpack.c.b16 %v963, %v963
        %v969 = vpack.c.b16 %v964, %v964
        %v970 = vpack.c.b16 %v965, %v965
        %v972 = vshrl.u32 %v966, 16
        %v974 = vrot.slane %v972, 7
        %v975 = vshll.u32 %v966, 16
        %v977 = vor.u32 %v974, %v975
        %v978 = vrot.slane %v974, 4
        %v980 = vshrl.u32 %v967, 16
        %v982 = vrot.slane %v980, 7
        %v983 = vshll.u32 %v967, 16
        %v985 = vor.u32 %v982, %v983
        %v986 = vsel %vm267, %v978, %v985
        %v987 = vrot.slane %v982, 4
        %v989 = vshrl.u32 %v968, 16
        %v991 = vrot.slane %v989, 7
        %v992 = vshll.u32 %v968, 16
        %v994 = vor.u32 %v991, %v992
        %v995 = vsel %vm267, %v987, %v994
        %v996 = vrot.slane %v991, 4
        %v998 = vshrl.u32 %v969, 16
        %v1000 = vrot.slane %v998, 7
        %v1001 = vshll.u32 %v969, 16
        %v1003 = vor.u32 %v1000, %v1001
        %v1004 = vsel %vm267, %v996, %v1003
        %v1005 = vrot.slane %v1000, 4
        %v1007 = vshrl.u32 %v970, 16
        %v1009 = vrot.slane %v1007, 7
        %v1010 = vshll.u32 %v970, 16
        %v1012 = vor.u32 %v1009, %v1010
        %v1013 = vsel %vm267, %v1005, %v1012
        %v1019 = vld [vmem:[#allocation2] sm:$0xf]
        %v1020 = vsel %vm290, %v977, %v1019
        %1021 = vst [vmem:[#allocation2] sm:$0xf] %v1020
        %1022 = vst [vmem:[#allocation2 + $0x4] sm:$0xf] %v986
        %1023 = vst [vmem:[#allocation2 + $0x8] sm:$0xf] %v995
        %1024 = vst [vmem:[#allocation2 + $0xc] sm:$0xf] %v1004
        %vm1025 = vsmask.f32 2304
        %vm1026 = vmand %vm533, %vm1025
        %v1027 = vld [vmem:[#allocation2 + $0x10] sm:$0x7]
        %v1028 = vsel %vm1026, %v1013, %v1027
        %1029 = vst [vmem:[#allocation2 + $0x10] sm:$0x7] %v1028
        %v1030 = vld [vmem:[#allocation2] sm:$0xf]
        %v1031 = vld [vmem:[#allocation2 + $0x4] sm:$0xf]
        %v1032 = vld [vmem:[#allocation2 + $0x8] sm:$0xf]
        %v1033 = vld [vmem:[#allocation2 + $0xc] sm:$0xf]
        %v1034 = vld [vmem:[#allocation2 + $0x10] sm:$0x3]
        %1035 = vst [vmem:[#allocation3] sm:$0xf] %v1030
        %1036 = vst [vmem:[#allocation3 + $0xc] sm:$0xf] %v1031
        %1037 = vst [vmem:[#allocation3 + $0x18] sm:$0xf] %v1032
        %1038 = vst [vmem:[#allocation3 + $0x24] sm:$0xf] %v1033
        %1039 = vst [vmem:[#allocation3 + $0x30] sm:$0x3] %v1034
        %v1040 = vld [vmem:[#allocation2] sm:$0xf]
        %v1041 = vld [vmem:[#allocation2 + $0x4] sm:$0xf]
        %v1042 = vld [vmem:[#allocation2 + $0x8] sm:$0xf]
        %v1043 = vld [vmem:[#allocation2 + $0xc] sm:$0xf]
        %v1044 = vld [vmem:[#allocation2 + $0x10] sm:$0x7]
        %v1046 = vshrl.u32 %v1040, 16
        %v1048 = vrot.slane %v1046, 4
        %v1049 = vshll.u32 %v1040, 16
        %v1051 = vrot.slane %v1049, 5
        %v1052 = vor.u32 %v1048, %v1051
        %v1053 = vrot.slane %v1052, 4
        %v1055 = vshll.u32 %v1041, 16
        %v1057 = vrot.slane %v1055, 5
        %v1058 = vsel %vm463, %v1053, %v1057
        %v1059 = vshrl.u32 %v1041, 16
        %v1061 = vrot.slane %v1059, 4
        %v1062 = vor.u32 %v1061, %v1057
        %v1063 = vrot.slane %v1062, 4
        %v1065 = vshll.u32 %v1042, 16
        %v1067 = vrot.slane %v1065, 5
        %v1068 = vsel %vm463, %v1063, %v1067
        %v1069 = vshrl.u32 %v1042, 16
        %v1071 = vrot.slane %v1069, 4
        %v1072 = vor.u32 %v1071, %v1067
        %v1073 = vrot.slane %v1072, 4
        %v1075 = vshll.u32 %v1043, 16
        %v1077 = vrot.slane %v1075, 5
        %v1078 = vsel %vm463, %v1073, %v1077
        %v1079 = vshrl.u32 %v1043, 16
        %v1081 = vrot.slane %v1079, 4
        %v1082 = vor.u32 %v1081, %v1077
        %v1083 = vrot.slane %v1082, 4
        %v1085 = vshll.u32 %v1044, 16
        %v1087 = vrot.slane %v1085, 5
        %v1088 = vsel %vm463, %v1083, %v1087
        %v1089 = vshrl.u32 %v1044, 16
        %v1091 = vrot.slane %v1089, 4
        %v1092 = vor.u32 %v1091, %v1087
        %v1093 = vrot.slane %v1092, 4
        %1099 = vst [vmem:[#allocation3 + $0x4] sm:$0xf] %v1058
        %1100 = vst [vmem:[#allocation3 + $0x10] sm:$0xf] %v1068
        %1101 = vst [vmem:[#allocation3 + $0x1c] sm:$0xf] %v1078
        %1102 = vst [vmem:[#allocation3 + $0x28] sm:$0xf] %v1088
        %1103 = vst [vmem:[#allocation3 + $0x34] sm:$0x3] %v1093
        %v1104 = vld [vmem:[#allocation2] sm:$0xe]
        %v1105 = vld [vmem:[#allocation2 + $0x4] sm:$0xf]
        %v1106 = vld [vmem:[#allocation2 + $0x8] sm:$0xf]
        %v1107 = vld [vmem:[#allocation2 + $0xc] sm:$0xf]
        %v1108 = vld [vmem:[#allocation2 + $0x10] sm:$0x7]
        %v1114 = vrot.slane %v1104, 5
        %v1115 = vrot.slane %v1114, 4
        %v1116 = vrot.slane %v1105, 5
        %v1117 = vsel %vm535, %v1115, %v1116
        %v1118 = vrot.slane %v1116, 4
        %v1119 = vrot.slane %v1106, 5
        %v1120 = vsel %vm535, %v1118, %v1119
        %v1121 = vrot.slane %v1119, 4
        %v1122 = vrot.slane %v1107, 5
        %v1123 = vsel %vm535, %v1121, %v1122
        %v1124 = vrot.slane %v1122, 4
        %v1125 = vrot.slane %v1108, 5
        %v1126 = vsel %vm535, %v1124, %v1125
        %v1127 = vrot.slane %v1125, 4
        %1133 = vst [vmem:[#allocation3 + $0x8] sm:$0xf] %v1117
        %1134 = vst [vmem:[#allocation3 + $0x14] sm:$0xf] %v1120
        %1135 = vst [vmem:[#allocation3 + $0x20] sm:$0xf] %v1123
        %1136 = vst [vmem:[#allocation3 + $0x2c] sm:$0xf] %v1126
        %1137 = vst [vmem:[#allocation3 + $0x38] sm:$0x3] %v1127
        %v1138 = vld [vmem:[#allocation3] sm:$0xff]
        %v1139 = vld [vmem:[#allocation3 + $0x8] sm:$0xf]
        %v1140 = vld [vmem:[#allocation3 + $0xc] sm:$0xff]
        %v1141 = vld [vmem:[#allocation3 + $0x14] sm:$0xf]
        %v1142 = vld [vmem:[#allocation3 + $0x18] sm:$0xff]
        %v1143 = vld [vmem:[#allocation3 + $0x20] sm:$0xf]
        %v1144 = vld [vmem:[#allocation3 + $0x24] sm:$0xff]
        %v1145 = vld [vmem:[#allocation3 + $0x2c] sm:$0xf]
        %v1146 = vld [vmem:[#allocation3 + $0x30] sm:$0x33]
        %v1147 = vld [vmem:[#allocation3 + $0x38] sm:$0x3]
        %v1148 = vld [vmem:[#allocation9] sm:$0xf]
        %v1149 = vld [vmem:[#allocation9 + $0x4] sm:$0xf]
        %v1150 = vld [vmem:[#allocation9 + $0x8] sm:$0xf]
        %v1151 = vld [vmem:[#allocation9 + $0xc] sm:$0xf]
        %v1152 = vld [vmem:[#allocation9 + $0x10] sm:$0xf]
        %v1153 = vld [vmem:[#allocation9 + $0x14] sm:$0xf]
        %v1154 = vld [vmem:[#allocation9 + $0x18] sm:$0xf]
        %v1155 = vld [vmem:[#allocation9 + $0x1c] sm:$0xf]
        %v1156 = vld [vmem:[#allocation9 + $0x20] sm:$0xf]
        %v1157 = vld [vmem:[#allocation9 + $0x24] sm:$0xf]
        %v1158 = vld [vmem:[#allocation9 + $0x28] sm:$0xf]
        %v1159 = vld [vmem:[#allocation9 + $0x2c] sm:$0xf]
        %v1160 = vld [vmem:[#allocation9 + $0x30] sm:$0xf]
        %v1161 = vld [vmem:[#allocation9 + $0x34] sm:$0xf]
        %v1162 = vld [vmem:[#allocation9 + $0x38] sm:$0xf]
        %v1163 = vld [vmem:[#allocation9 + $0x3c] sm:$0xf]
        %v1164 = vld [vmem:[#allocation9 + $0x40] sm:$0xf]
        %v1165 = vld [vmem:[#allocation9 + $0x44] sm:$0xf]
        %v1166 = vld [vmem:[#allocation9 + $0x48] sm:$0xf]
        %v1167 = vld [vmem:[#allocation9 + $0x4c] sm:$0xf]
        %v1168 = vld [vmem:[#allocation9 + $0x50] sm:$0xf]
        %v1169 = vld [vmem:[#allocation9 + $0x54] sm:$0xf]
        %v1170 = vld [vmem:[#allocation9 + $0x58] sm:$0xf]
        %v1171 = vld [vmem:[#allocation9 + $0x5c] sm:$0xf]
        %v1172 = vld [vmem:[#allocation9 + $0x60] sm:$0xf]
        %v1173 = vld [vmem:[#allocation9 + $0x64] sm:$0xf]
        %v1174 = vld [vmem:[#allocation9 + $0x68] sm:$0xf]
        %v1175 = vld [vmem:[#allocation9 + $0x6c] sm:$0xf]
        %v1176 = vld [vmem:[#allocation9 + $0x70] sm:$0xf]
        %v1177 = vld [vmem:[#allocation9 + $0x74] sm:$0xf]
        %v1178 = vld [vmem:[#allocation9 + $0x78] sm:$0xf]
        %v1179 = vld [vmem:[#allocation9 + $0x7c] sm:$0xf]
        %v1180 = vld [vmem:[#allocation9 + $0x80] sm:$0xf]
        %v1181 = vld [vmem:[#allocation9 + $0x84] sm:$0xf]
        %v1182 = vld [vmem:[#allocation9 + $0x88] sm:$0xf]
        %v1183 = vld [vmem:[#allocation9 + $0x8c] sm:$0xf]
        %v1184 = vld [vmem:[#allocation9 + $0x90] sm:$0xf]
        %v1185 = vld [vmem:[#allocation9 + $0x94] sm:$0xf]
        %v1186 = vld [vmem:[#allocation9 + $0x98] sm:$0xf]
        %v1187 = vld [vmem:[#allocation9 + $0x9c] sm:$0xf]
        %v1188 = vld [vmem:[#allocation9 + $0xa0] sm:$0xf]
        %v1189 = vld [vmem:[#allocation9 + $0xa4] sm:$0xf]
        %v1190 = vld [vmem:[#allocation9 + $0xa8] sm:$0xf]
        %v1191 = vld [vmem:[#allocation9 + $0xac] sm:$0xf]
        %v1192 = vld [vmem:[#allocation9 + $0xb0] sm:$0xf]
        %v1193 = vld [vmem:[#allocation9 + $0xb4] sm:$0xf]
        %v1194 = vld [vmem:[#allocation9 + $0xb8] sm:$0xf]
        %v1195 = vld [vmem:[#allocation9 + $0xbc] sm:$0xf]
        %v1196 = vlaneseq
        %v1197 = vshrl.u32 %v1196, 7
        %v1198 = vsub.s32 2, %v1197
        %v1199 = vrot.slane %v253, %v1198
        %v1210 = vunpack.c.l.b16 %v1138
        %v1211 = vunpack.c.h.b16 %v1138
        %v1212 = vunpack.c.l.b16 %v1139
        %v1213 = vunpack.c.l.b16 %v1140
        %v1214 = vunpack.c.h.b16 %v1140
        %v1215 = vunpack.c.l.b16 %v1141
        %v1216 = vunpack.c.l.b16 %v1142
        %v1217 = vunpack.c.h.b16 %v1142
        %v1218 = vunpack.c.l.b16 %v1143
        %v1219 = vunpack.c.l.b16 %v1144
        %v1220 = vunpack.c.h.b16 %v1144
        %v1221 = vunpack.c.l.b16 %v1145
        %v1222 = vunpack.c.l.b16 %v1146
        %v1223 = vunpack.c.h.b16 %v1146
        %v1224 = vunpack.c.l.b16 %v1147
        %v1225 = vpack.c.b16 %v1213, %v1210
        %v1226 = vpack.c.b16 %v1214, %v1211
        %v1227 = vpack.c.b16 %v1215, %v1212
        %v1228 = vpack.c.b16 %v1219, %v1216
        %v1229 = vpack.c.b16 %v1220, %v1217
        %v1230 = vpack.c.b16 %v1221, %v1218
        %v1231 = vpack.c.b16 %v1222, %v1222
        %v1232 = vpack.c.b16 %v1223, %v1223
        %v1233 = vpack.c.b16 %v1224, %v1224
        %v1291 = vunpack.c.l.b16 %v1148
        %v1292 = vunpack.c.l.b16 %v1149
        %v1293 = vunpack.c.l.b16 %v1150
        %v1294 = vunpack.c.l.b16 %v1151
        %v1295 = vunpack.c.l.b16 %v1152
        %v1296 = vunpack.c.l.b16 %v1153
        %v1297 = vunpack.c.l.b16 %v1154
        %v1298 = vunpack.c.l.b16 %v1155
        %v1299 = vunpack.c.l.b16 %v1156
        %v1300 = vunpack.c.l.b16 %v1157
        %v1301 = vunpack.c.l.b16 %v1158
        %v1302 = vunpack.c.l.b16 %v1159
        %v1303 = vunpack.c.l.b16 %v1160
        %v1304 = vunpack.c.l.b16 %v1161
        %v1305 = vunpack.c.l.b16 %v1162
        %v1306 = vunpack.c.l.b16 %v1163
        %v1307 = vunpack.c.l.b16 %v1164
        %v1308 = vunpack.c.l.b16 %v1165
        %v1309 = vunpack.c.l.b16 %v1166
        %v1310 = vunpack.c.l.b16 %v1167
        %v1311 = vunpack.c.l.b16 %v1168
        %v1312 = vunpack.c.l.b16 %v1169
        %v1313 = vunpack.c.l.b16 %v1170
        %v1314 = vunpack.c.l.b16 %v1171
        %v1315 = vunpack.c.l.b16 %v1172
        %v1316 = vunpack.c.l.b16 %v1173
        %v1317 = vunpack.c.l.b16 %v1174
        %v1318 = vunpack.c.l.b16 %v1175
        %v1319 = vunpack.c.l.b16 %v1176
        %v1320 = vunpack.c.l.b16 %v1177
        %v1321 = vunpack.c.l.b16 %v1178
        %v1322 = vunpack.c.l.b16 %v1179
        %v1323 = vunpack.c.l.b16 %v1180
        %v1324 = vunpack.c.l.b16 %v1181
        %v1325 = vunpack.c.l.b16 %v1182
        %v1326 = vunpack.c.l.b16 %v1183
        %v1327 = vunpack.c.l.b16 %v1184
        %v1328 = vunpack.c.l.b16 %v1185
        %v1329 = vunpack.c.l.b16 %v1186
        %v1330 = vunpack.c.l.b16 %v1187
        %v1331 = vunpack.c.l.b16 %v1188
        %v1332 = vunpack.c.l.b16 %v1189
        %v1333 = vunpack.c.l.b16 %v1190
        %v1334 = vunpack.c.l.b16 %v1191
        %v1335 = vunpack.c.l.b16 %v1192
        %v1336 = vunpack.c.l.b16 %v1193
        %v1337 = vunpack.c.l.b16 %v1194
        %v1338 = vunpack.c.l.b16 %v1195
        %v1339 = vpack.c.b16 %v1292, %v1291
        %v1340 = vpack.c.b16 %v1294, %v1293
        %v1341 = vpack.c.b16 %v1296, %v1295
        %v1342 = vpack.c.b16 %v1298, %v1297
        %v1343 = vpack.c.b16 %v1300, %v1299
        %v1344 = vpack.c.b16 %v1302, %v1301
        %v1345 = vpack.c.b16 %v1304, %v1303
        %v1346 = vpack.c.b16 %v1306, %v1305
        %v1347 = vpack.c.b16 %v1308, %v1307
        %v1348 = vpack.c.b16 %v1310, %v1309
        %v1349 = vpack.c.b16 %v1312, %v1311
        %v1350 = vpack.c.b16 %v1314, %v1313
        %v1351 = vpack.c.b16 %v1316, %v1315
        %v1352 = vpack.c.b16 %v1318, %v1317
        %v1353 = vpack.c.b16 %v1320, %v1319
        %v1354 = vpack.c.b16 %v1322, %v1321
        %v1355 = vpack.c.b16 %v1324, %v1323
        %v1356 = vpack.c.b16 %v1326, %v1325
        %v1357 = vpack.c.b16 %v1328, %v1327
        %v1358 = vpack.c.b16 %v1330, %v1329
        %v1359 = vpack.c.b16 %v1332, %v1331
        %v1360 = vpack.c.b16 %v1334, %v1333
        %v1361 = vpack.c.b16 %v1336, %v1335
        %v1362 = vpack.c.b16 %v1338, %v1337
        %1387 = vmatprep.subr.bf16.mxu0 0
        %1388 = vmatpush1.bf16.msra.mxu0 %v1339
        %1389 = vmatprep.subr.bf16.mxu0 0
        %1390 = vmatpush1.bf16.msra.mxu0 %v1340
        %1391 = vmatprep.subr.bf16.mxu0 0
        %1392 = vmatpush1.bf16.msra.mxu0 %v1341
        %1393 = vmatprep.subr.bf16.mxu0 0
        %1394 = vmatpush1.bf16.msra.mxu0 %v1342
        %1395 = vmatprep.subr.bf16.mxu0 0
        %1396 = vmatpush1.bf16.msra.mxu0 %v1343
        %1397 = vmatprep.subr.bf16.mxu0 0
        %1398 = vmatpush1.bf16.msra.mxu0 %v1344
        %1399 = vmatprep.subr.bf16.mxu0 0
        %1400 = vmatpush1.bf16.msra.mxu0 %v1345
        %1401 = vmatprep.subr.bf16.mxu0 0
        %1402 = vmatpush1.bf16.msra.mxu0 %v1346
        %1403 = vmatprep.subr.bf16.mxu0 0
        %1404 = vmatpush1.bf16.msra.mxu0 %v1347
        %1405 = vmatprep.subr.bf16.mxu0 0
        %1406 = vmatpush1.bf16.msra.mxu0 %v1348
        %1407 = vmatprep.subr.bf16.mxu0 0
        %1408 = vmatpush1.bf16.msra.mxu0 %v1349
        %1409 = vmatprep.subr.bf16.mxu0 0
        %1410 = vmatpush1.bf16.msra.mxu0 %v1350
        %1411 = vmatprep.subr.bf16.mxu0 0
        %1412 = vmatpush1.bf16.msra.mxu0 %v1351
        %1413 = vmatprep.subr.bf16.mxu0 0
        %1414 = vmatpush1.bf16.msra.mxu0 %v1352
        %1415 = vmatprep.subr.bf16.mxu0 0
        %1416 = vmatpush1.bf16.msra.mxu0 %v1353
        %1417 = vmatprep.subr.bf16.mxu0 0
        %1418 = vmatpush1.bf16.msra.mxu0 %v1354
        %1419 = vmatprep.mubr.bf16.mxu0 %v1226
        %1420 = vmatmul.mubr.bf16.gmra.mrb[0].mxu0 %v1225
        %v1421 = vpop.f32.mrb[0].mxu0
        %v1422 = vadd.f32 %v1199, %v1421
        %v1423 = vpop.f32.mrb[0].mxu0
        %v1424 = vpop.f32.mrb[0].mxu0
        %v1425 = vadd.f32 %v1199, %v1424
        %v1426 = vpop.f32.mrb[0].mxu0
        %1427 = vmatprep.mubr.bf16.mxu0 %v1229
        %1428 = vmatmul.mubr.bf16.gmra.mrb[0].mxu0 %v1228
        %v1429 = vpop.f32.mrb[0].mxu0
        %v1430 = vadd.f32 %v1199, %v1429
        %v1431 = vpop.f32.mrb[0].mxu0
        %v1432 = vpop.f32.mrb[0].mxu0
        %v1433 = vadd.f32 %v1199, %v1432
        %v1434 = vpop.f32.mrb[0].mxu0
        %1435 = vmatprep.mubr.bf16.mxu0 %v1232
        %1436 = vmatmul.mubr.bf16.gmra.mrb[0].mxu0 %v1231
        %v1437 = vpop.f32.mrb[0].mxu0
        %v1438 = vadd.f32 %v1199, %v1437
        %v1439 = vpop.f32.mrb[0].mxu0
        %v1440 = vpop.f32.mrb[0].mxu0
        %v1441 = vpop.f32.mrb[0].mxu0
        %1442 = vdwg.mxu0
        %1443 = vmatprep.subr.bf16.mxu0 0
        %1444 = vmatpush1.bf16.msra.mxu0 %v1355
        %1445 = vmatprep.subr.bf16.mxu0 0
        %1446 = vmatpush1.bf16.msra.mxu0 %v1356
        %1447 = vmatprep.subr.bf16.mxu0 0
        %1448 = vmatpush1.bf16.msra.mxu0 %v1357
        %1449 = vmatprep.subr.bf16.mxu0 0
        %1450 = vmatpush1.bf16.msra.mxu0 %v1358
        %1451 = vmatprep.subr.bf16.mxu0 0
        %1452 = vmatpush1.bf16.msra.mxu0 %v1359
        %1453 = vmatprep.subr.bf16.mxu0 0
        %1454 = vmatpush1.bf16.msra.mxu0 %v1360
        %1455 = vmatprep.subr.bf16.mxu0 0
        %1456 = vmatpush1.bf16.msra.mxu0 %v1361
        %1457 = vmatprep.subr.bf16.mxu0 0
        %1458 = vmatpush1.bf16.msra.mxu0 %v1362
        %1459 = vmatprep.subr.bf16.mxu0 0
        %1460 = vmatpush1.bf16.msra.mxu0 0
        %1461 = vmatprep.subr.bf16.mxu0 0
        %1462 = vmatpush1.bf16.msra.mxu0 0
        %1463 = vmatprep.subr.bf16.mxu0 0
        %1464 = vmatpush1.bf16.msra.mxu0 0
        %1465 = vmatprep.subr.bf16.mxu0 0
        %1466 = vmatpush1.bf16.msra.mxu0 0
        %1467 = vmatprep.subr.bf16.mxu0 0
        %1468 = vmatpush1.bf16.msra.mxu0 0
        %1469 = vmatprep.subr.bf16.mxu0 0
        %1470 = vmatpush1.bf16.msra.mxu0 0
        %1471 = vmatprep.subr.bf16.mxu0 0
        %1472 = vmatpush1.bf16.msra.mxu0 0
        %1473 = vmatprep.subr.bf16.mxu0 0
        %1474 = vmatpush1.bf16.msra.mxu0 0
        %1475 = vmatprep.mubr.bf16.mxu0 0
        %1476 = vmatmul.mubr.bf16.gmra.mrb[0].mxu0 %v1227
        %v1477 = vpop.f32.mrb[0].mxu0
        %v1478 = vadd.f32 %v1422, %v1477
        %v1479 = vpop.f32.mrb[0].mxu0
        %v1480 = vpop.f32.mrb[0].mxu0
        %v1481 = vadd.f32 %v1425, %v1480
        %v1482 = vpop.f32.mrb[0].mxu0
        %1483 = vmatprep.mubr.bf16.mxu0 0
        %1484 = vmatmul.mubr.bf16.gmra.mrb[0].mxu0 %v1230
        %v1485 = vpop.f32.mrb[0].mxu0
        %v1486 = vadd.f32 %v1430, %v1485
        %v1487 = vpop.f32.mrb[0].mxu0
        %v1488 = vpop.f32.mrb[0].mxu0
        %v1489 = vadd.f32 %v1433, %v1488
        %v1490 = vpop.f32.mrb[0].mxu0
        %1491 = vmatprep.mubr.bf16.mxu0 0
        %1492 = vmatmul.mubr.bf16.gmra.mrb[0].mxu0 %v1233
        %v1493 = vpop.f32.mrb[0].mxu0
        %v1494 = vadd.f32 %v1438, %v1493
        %v1495 = vpop.f32.mrb[0].mxu0
        %v1496 = vpop.f32.mrb[0].mxu0
        %v1497 = vpop.f32.mrb[0].mxu0
        %1498 = vdwg.mxu0
        %v1499 = vadd.f32 %v1478, %v249
        %v1500 = vadd.f32 %v1481, %v250
        %1501 = vst [vmem:[%s245] sm:$0xff] %v1499
        %1502 = vst [vmem:[%s245 + $0x8] sm:$0xff] %v1500
        %vm1505 = vcmask 1041408
        %v1506 = vrot.slane %v251, 6
        %v1507 = vrot.slane %v252, 6
        %v1508 = vsel %vm1505, %v1506, %v1507
        %v1512 = vadd.f32 %v1486, %v1506
        %v1513 = vadd.f32 %v1489, %v1508
        %v1514 = vadd.f32 %v1494, %v1507
        %s1515 = scalar_lea.vmem %s245, 16 [#allocation10]
        %1516 = vst [vmem:[%s1515 - $0x2] sm:$0xfc] %v1512
        %1517 = vst [vmem:[%s1515 + $0x6] sm:$0xff] %v1513
        %1518 = vst [vmem:[%s1515 + $0xe] sm:$0x3] %v1514
        %s1519 = sand.u32 %s119, 1
        %s1520 = scalar_lea.sflag [#allocation6], %s1519
        %s1521 = sand.u32 %s119, 1
        %s1522 = smul.addr %s1521, 32
        %s1523 = scalar_lea.vmem [#allocation10], %s1522
        // Predicated region
        $region49: #{tpu_custom_call.1} parent=35 // pred_check
          %p1524 = pneg %p129
        $region50: #{tpu_custom_call.1} parent=35 // pred_check_branch
          %1526 = sbr.rel (%p1524) target = $region52
        $region51: #{tpu_custom_call.1} parent=35 // pred_region
          %s1527 = smul.u32 2, %s22
          %s1529 = ssub.s32 512, 512
          %1530 = vsyncadd %s1520, %s1529
          %s1531 = smul.addr %s1527, 2
          %s1532 = smul.addr %s1531, 128
          %s1533 = scalar_lea.hbm %s4, %s1532
          %s1534 = sshll.u32 %s1523, 4
          %s1535 = int_to_ptr.vmem [resolvable:$true] %s1534
          %1540 = dma.vmem_to_hbm [thread:$0]  %s1535, 512, %s1533, %s1520, 128, 128, 8
        $region52: #{tpu_custom_call.1} parent=35 // pred_fallthru
          _
      $region36: #{tpu_custom_call.1} parent=5 // pred_fallthru
        _
      %p1541 = scmp.le.s32.totalorder 2, %s17
      // Predicated region
      $region53: #{tpu_custom_call.1} parent=5 // pred_check
        %p1542 = pneg %p1541
      $region54: #{tpu_custom_call.1} parent=5 // pred_check_branch
        %1544 = sbr.rel (%p1542) target = $region56
      $region55: #{tpu_custom_call.1} parent=5 // pred_region
        %s1545 = ssub.s32 %s17, 2
        // Predicated region
        $region57: #{tpu_custom_call.1} parent=55 // pred_check
          %p1546 = pneg %p135
        $region58: #{tpu_custom_call.1} parent=55 // pred_check_branch
          %1548 = sbr.rel (%p1546) target = $region60
        $region59: #{tpu_custom_call.1} parent=55 // pred_region
          %s1549 = sand.u32 %s120, 1
          %s1550 = scalar_lea.sflag [#allocation6], %s1549
          %s1551 = sand.u32 %s120, 1
          %s1552 = smul.addr %s1551, 32
          %s1553 = scalar_lea.vmem [#allocation10], %s1552
          %1554 = dma.done %s1550, 512
        $region60: #{tpu_custom_call.1} parent=55 // pred_fallthru
          _
      $region56: #{tpu_custom_call.1} parent=5 // pred_fallthru
        _
    $region6: #{tpu_custom_call.1} parent=1 // loop_footer
      %s21 = sadd.s32 1, %s17
    $region7: #{tpu_custom_call.1} parent=1 // loop_footer_branch
      %16 = sbr.rel target = $region3
    $region8: #{tpu_custom_call.1} parent=1 // loop_exit
      _
    %1555 = vsyncpa [#allocation5], 1
    %s1556 = scalar_lea.sflag [#allocation5], 1
    %1557 = vsyncpa %s1556, 1
    %1558 = vsyncpa [#allocation8], 1
    %1559 = vsyncpa [#allocation6], 1
    %s1560 = scalar_lea.sflag [#allocation6], 1
    %1561 = vsyncpa %s1560, 1

</llo_original>
